<compile_context>
chip_gen: v7x
topology: tpu7x:2x2x1
jax: 0.10.0
libtpu: 0.0.40
codegen_flags: <defaults>
</compile_context>

<pallas_src>
import functools
import math

import jax
import jax.numpy as jnp
from jax import lax
from jax.experimental import pallas as pl
from jax.experimental.pallas import tpu as pltpu


# ---------------------------------------------------------------------------
# Kernel 1: LayerNorm1 + fused QKV projection + rotary, per (batch, row tile)
# ---------------------------------------------------------------------------
def qkv_rope_kernel(x_ref, ln_w_ref, ln_b_ref, wqkv_ref, cos_ref, sin_ref,
                    q_ref, k_ref, v_ref, *, num_heads, head_dim, eps=1e-5):
    D = num_heads * head_dim
    half = head_dim // 2

    x = x_ref[0].astype(jnp.float32)                       # (tr, D)
    mu = jnp.mean(x, axis=-1, keepdims=True)
    var = jnp.mean((x - mu) ** 2, axis=-1, keepdims=True)
    xn = (x - mu) * lax.rsqrt(var + eps) * ln_w_ref[...] + ln_b_ref[...]

    # One wide bf16 MXU matmul with f32 accumulation: (tr, D) @ (D, 3D).
    # TODO(synk): at large D (e.g. 4096) add a grid axis over the 3D output columns
    # so the wqkv block does not have to be fully VMEM-resident.
    qkv = jnp.dot(xn.astype(jnp.bfloat16), wqkv_ref[...],
                  preferred_element_type=jnp.float32)      # (tr, 3D) f32
    q = qkv[:, :D]
    k = qkv[:, D:2 * D]
    v = qkv[:, 2 * D:]

    cos = cos_ref[...]                                     # (tr, hd) f32
    sin = sin_ref[...]

    # TODO(synk): for large num_heads replace the unrolled loop with lax.fori_loop
    # over pl.ds(pl.multiple_of(h*head_dim, 128), head_dim) slices.
    for h in range(num_heads):                             # static, small
        sl = slice(h * head_dim, (h + 1) * head_dim)
        qh = q[:, sl]
        kh = k[:, sl]
        q_rot = jnp.concatenate([-qh[:, half:], qh[:, :half]], axis=-1)
        k_rot = jnp.concatenate([-kh[:, half:], kh[:, :half]], axis=-1)
        q_ref[0, :, sl] = (qh * cos + q_rot * sin).astype(q_ref.dtype)
        k_ref[0, :, sl] = (kh * cos + k_rot * sin).astype(k_ref.dtype)
    v_ref[0] = v.astype(v_ref.dtype)


# ---------------------------------------------------------------------------
# Kernel 2: flash attention (online softmax over kv tiles), per (batch, q tile)
# ---------------------------------------------------------------------------
def flash_attn_kernel(q_ref, k_ref, v_ref, o_ref, m_sc, l_sc, acc_sc,
                      *, num_heads, head_dim, tq, tk):
    qi = pl.program_id(1)
    ki = pl.program_id(2)
    nk = pl.num_programs(2)

    @pl.when(ki == 0)
    def _init():
        m_sc[...] = jnp.full_like(m_sc, -1e30)
        l_sc[...] = jnp.zeros_like(l_sc)
        acc_sc[...] = jnp.zeros_like(acc_sc)

    def flash_update(apply_mask):
        q = q_ref[0]                                       # (tq, D) bf16, pre-scaled
        k = k_ref[0]                                       # (tk, D) bf16
        v = v_ref[0]                                       # (tk, D) bf16
        if apply_mask:
            rows = qi * tq + lax.broadcasted_iota(jnp.int32, (tq, tk), 0)
            cols = ki * tk + lax.broadcasted_iota(jnp.int32, (tq, tk), 1)
            keep = cols <= rows
        # TODO(synk): for large num_heads switch to lax.fori_loop to bound vreg
        # live ranges.
        for h in range(num_heads):                         # static, small
            sl = slice(h * head_dim, (h + 1) * head_dim)
            s = lax.dot_general(q[:, sl], k[:, sl],        # q_h @ k_h^T on the MXU
                                (((1,), (1,)), ((), ())),
                                preferred_element_type=jnp.float32)   # (tq, tk)
            if apply_mask:
                s = jnp.where(keep, s, -1e30)
            # m/l are stored lane-dense (all 128 lanes replicated) so both the
            # loads and the stores below are full-width unmasked vector ops.
            m_old = m_sc[h]                                              # (tq, 128)
            m_new = jnp.maximum(m_old, jnp.max(s, axis=-1, keepdims=True))
            alpha = jnp.exp(m_old - m_new)                               # (tq, 128)
            p = jnp.exp(s - m_new[:, :1])                                # (tq, tk)
            l_sc[h] = alpha * l_sc[h] + jnp.sum(p, axis=-1, keepdims=True)
            acc_sc[:, sl] = alpha[:, :1] * acc_sc[:, sl] + jnp.dot(
                p.astype(jnp.bfloat16), v[:, sl],
                preferred_element_type=jnp.float32)
            m_sc[h] = m_new

    # Tile classification (tiles fully ABOVE the diagonal do nothing; their K/V
    # DMA is also suppressed by the clamped index_map in the wrapper).
    needs_mask = (ki + 1) * tk > qi * tq + 1       # tile touches the diagonal
    has_valid = ki * tk < (qi + 1) * tq            # tile has any valid entries

    @pl.when(jnp.logical_and(has_valid, needs_mask))
    def _diagonal():
        flash_update(True)

    @pl.when(jnp.logical_not(needs_mask))          # fully below the diagonal
    def _interior():
        flash_update(False)

    @pl.when(ki == nk - 1)
    def _finalize():
        for h in range(num_heads):
            sl = slice(h * head_dim, (h + 1) * head_dim)
            acc_sc[:, sl] = acc_sc[:, sl] / l_sc[h][:, :1]
        o_ref[0] = acc_sc[...].astype(o_ref.dtype)


# ---------------------------------------------------------------------------
# Kernel 3: wo + residual1 + LayerNorm2 + GLU + residual2, per (batch, row tile)
# ---------------------------------------------------------------------------
def out_glu_kernel(x_ref, o_ref, wo_ref, ln_w_ref, ln_b_ref, w12_ref, w3_ref,
                   out_ref, *, mid_dim, eps=1e-5):
    attn = jnp.dot(o_ref[0], wo_ref[...],
                   preferred_element_type=jnp.float32)     # (tr, D)
    x1 = x_ref[0].astype(jnp.float32) + attn               # residual 1

    mu = jnp.mean(x1, axis=-1, keepdims=True)
    var = jnp.mean((x1 - mu) ** 2, axis=-1, keepdims=True)
    xn2 = (x1 - mu) * lax.rsqrt(var + eps) * ln_w_ref[...] + ln_b_ref[...]
    xn2 = xn2.astype(jnp.bfloat16)

    # w1/w2 stacked on the host -> one MXU pass, wider lane-dense output.
    # TODO(synk): tile the mid dimension for large mid_dim models.
    ug = jnp.dot(xn2, w12_ref[...], preferred_element_type=jnp.float32)  # (tr, 2*mid)
    u = ug[:, :mid_dim]
    g = ug[:, mid_dim:]
    hgl = ((u * jax.nn.sigmoid(u)) * g).astype(jnp.bfloat16)             # silu(u)*g
    ff = jnp.dot(hgl, w3_ref[...], preferred_element_type=jnp.float32)
    out_ref[0] = (x1 + ff).astype(out_ref.dtype)                         # residual 2


# ---------------------------------------------------------------------------
# Host-side helpers + wrapper
# ---------------------------------------------------------------------------
def make_rotary(seq_len, head_dim, base=10000.0):
    inv_freq = 1.0 / (base ** (jnp.arange(0, head_dim, 2, dtype=jnp.float32) / head_dim))
    t = jnp.arange(seq_len, dtype=jnp.float32)
    freqs = jnp.outer(t, inv_freq)                     # (N, hd/2)
    emb = jnp.concatenate([freqs, freqs], axis=-1)     # (N, hd)
    return jnp.cos(emb), jnp.sin(emb)


def init_params(key, embed_dim, mid_dim):
    ks = jax.random.split(key, 7)
    std = 0.02
    return {
        "ln1_w": jnp.ones((1, embed_dim), jnp.float32),
        "ln1_b": jnp.zeros((1, embed_dim), jnp.float32),
        "wq": std * jax.random.normal(ks[0], (embed_dim, embed_dim), jnp.float32),
        "wk": std * jax.random.normal(ks[1], (embed_dim, embed_dim), jnp.float32),
        "wv": std * jax.random.normal(ks[2], (embed_dim, embed_dim), jnp.float32),
        "wo": std * jax.random.normal(ks[3], (embed_dim, embed_dim), jnp.float32),
        "ln2_w": jnp.ones((1, embed_dim), jnp.float32),
        "ln2_b": jnp.zeros((1, embed_dim), jnp.float32),
        "w1": std * jax.random.normal(ks[4], (embed_dim, mid_dim), jnp.float32),
        "w2": std * jax.random.normal(ks[5], (embed_dim, mid_dim), jnp.float32),
        "w3": std * jax.random.normal(ks[6], (mid_dim, embed_dim), jnp.float32),
    }


def _vmem_limit_bytes():
    # Per-generation scoped-VMEM budget with headroom: ~100 MiB on v5e/v6e
    # (128 MiB physical), ~48 MiB on v7x (64 MiB physical).
    try:
        cap = int(pltpu.get_tpu_info().vmem_capacity_bytes)
    except Exception:
        cap = 128 * 1024 * 1024
    return int(max(32 * 2**20, min(cap - 16 * 2**20, 100 * 2**20)))


def _default_tiles(seq_len):
    # v5e MXU is 4x128^2 -> 128-wide kv tiles already fill it; v6e/v7x MXU is
    # 256-wide -> bigger kv tiles pay off (weights live in kernel 3, not here).
    try:
        kind = jax.devices()[0].device_kind.lower()
    except Exception:
        kind = ""
    tk = 128 if "v5" in kind else 256
    return min(128, seq_len), min(tk, seq_len)


def transformer_layer(x, params, num_heads, base=10000.0, tq=None, tk=None):
    # TODO(synk): incremental decoding (past_key_value != None) is not implemented;
    # this computes the full-sequence forward and returns the fresh (k, v) cache.
    B, N, D = x.shape
    assert D % num_heads == 0
    hd = D // num_heads
    assert hd % 2 == 0
    mid = params["w1"].shape[1]

    dtq, dtk = _default_tiles(N)
    tq = dtq if tq is None else min(tq, N)
    tk = dtk if tk is None else min(tk, N)
    assert N % tq == 0 and N % tk == 0, "seq length must divide by tile sizes"
    nr, nq, nk = N // tq, N // tq, N // tk

    # Host-side (free) weight prep: fold 1/sqrt(hd) into wq, stack q/k/v into one
    # (D, 3D) bf16 matrix, stack w1/w2 into one (D, 2*mid) bf16 matrix.
    scale = 1.0 / math.sqrt(hd)
    wqkv = jnp.concatenate(
        [params["wq"] * scale, params["wk"], params["wv"]], axis=1
    ).astype(jnp.bfloat16)
    w12 = jnp.concatenate([params["w1"], params["w2"]], axis=1).astype(jnp.bfloat16)
    cos, sin = make_rotary(N, hd, base)

    vmem_limit = _vmem_limit_bytes()

    # ---- kernel 1: LN1 + fused QKV + rope, lane-dense (B, N, D) bf16 outputs ----
    k1 = functools.partial(qkv_rope_kernel, num_heads=num_heads, head_dim=hd)
    q_rot, k_rot, v_new = pl.pallas_call(
        k1,
        out_shape=(
            jax.ShapeDtypeStruct((B, N, D), jnp.bfloat16),   # q_rot (internal)
            jax.ShapeDtypeStruct((B, N, D), jnp.bfloat16),   # k cache (rope'd)
            jax.ShapeDtypeStruct((B, N, D), jnp.bfloat16),   # v cache
        ),
        grid=(B, nr),
        in_specs=[
            pl.BlockSpec((1, tq, D), lambda b, r: (b, r, 0)),     # x
            pl.BlockSpec((1, D), lambda b, r: (0, 0)),            # ln1 w
            pl.BlockSpec((1, D), lambda b, r: (0, 0)),            # ln1 b
            pl.BlockSpec((D, 3 * D), lambda b, r: (0, 0)),        # stacked wqkv
            pl.BlockSpec((tq, hd), lambda b, r: (r, 0)),          # cos
            pl.BlockSpec((tq, hd), lambda b, r: (r, 0)),          # sin
        ],
        out_specs=(
            pl.BlockSpec((1, tq, D), lambda b, r: (b, r, 0)),
            pl.BlockSpec((1, tq, D), lambda b, r: (b, r, 0)),
            pl.BlockSpec((1, tq, D), lambda b, r: (b, r, 0)),
        ),
        compiler_params=pltpu.CompilerParams(
            dimension_semantics=("parallel", "parallel"),
            vmem_limit_bytes=vmem_limit),
    )(x, params["ln1_w"], params["ln1_b"], wqkv, cos, sin)

    # ---- kernel 2: flash attention (no weights resident, minimal VMEM) ----
    # K/V block index is clamped to the last block touching the causal diagonal:
    # blocks fully above the diagonal keep the same (stale) index, so Pallas does
    # not re-DMA them (~2x less K/V HBM read traffic for long sequences).
    def kv_index(b, i, j):
        return (b, jnp.minimum(j, ((i + 1) * tq - 1) // tk), 0)

    k2 = functools.partial(flash_attn_kernel, num_heads=num_heads, head_dim=hd,
                           tq=tq, tk=tk)
    attn_o = pl.pallas_call(
        k2,
        out_shape=jax.ShapeDtypeStruct((B, N, D), jnp.bfloat16),
        grid=(B, nq, nk),
        in_specs=[
            pl.BlockSpec((1, tq, D), lambda b, i, j: (b, i, 0)),  # q_rot
            pl.BlockSpec((1, tk, D), kv_index),                   # k_rot
            pl.BlockSpec((1, tk, D), kv_index),                   # v
        ],
        out_specs=pl.BlockSpec((1, tq, D), lambda b, i, j: (b, i, 0)),
        scratch_shapes=[
            pltpu.VMEM((num_heads, tq, 128), jnp.float32),   # running max (lane-dense)
            pltpu.VMEM((num_heads, tq, 128), jnp.float32),   # running sum (lane-dense)
            pltpu.VMEM((tq, D), jnp.float32),                # unnormalized head outs
        ],
        compiler_params=pltpu.CompilerParams(
            dimension_semantics=("parallel", "parallel", "arbitrary"),
            vmem_limit_bytes=vmem_limit),
    )(q_rot, k_rot, v_new)

    # ---- kernel 3: wo + residual + LN2 + GLU + residual ----
    k3 = functools.partial(out_glu_kernel, mid_dim=mid)
    out = pl.pallas_call(
        k3,
        out_shape=jax.ShapeDtypeStruct((B, N, D), x.dtype),
        grid=(B, nr),
        in_specs=[
            pl.BlockSpec((1, tq, D), lambda b, r: (b, r, 0)),     # x (residual)
            pl.BlockSpec((1, tq, D), lambda b, r: (b, r, 0)),     # attention output
            pl.BlockSpec((D, D), lambda b, r: (0, 0)),            # wo
            pl.BlockSpec((1, D), lambda b, r: (0, 0)),            # ln2 w
            pl.BlockSpec((1, D), lambda b, r: (0, 0)),            # ln2 b
            pl.BlockSpec((D, 2 * mid), lambda b, r: (0, 0)),      # stacked w1|w2
            pl.BlockSpec((mid, D), lambda b, r: (0, 0)),          # w3
        ],
        out_specs=pl.BlockSpec((1, tq, D), lambda b, r: (b, r, 0)),
        compiler_params=pltpu.CompilerParams(
            dimension_semantics=("parallel", "parallel"),
            vmem_limit_bytes=vmem_limit),
    )(x, attn_o, params["wo"].astype(jnp.bfloat16),
      params["ln2_w"], params["ln2_b"], w12, params["w3"].astype(jnp.bfloat16))

    # KV cache in the PyTorch layout (B, H, N, hd), kept in bf16 (kernel contract);
    # the reshape/transpose is free layout plumbing in XLA.
    k_cache = k_rot.reshape(B, N, num_heads, hd).transpose(0, 2, 1, 3)
    v_cache = v_new.reshape(B, N, num_heads, hd).transpose(0, 2, 1, 3)
    return out, (k_cache, v_cache)


# ---------------- pure-JAX reference (same math, f32, HIGHEST precision) ----
def reference(x, params, num_heads, base=10000.0):
    B, N, D = x.shape
    hd = D // num_heads
    cos, sin = make_rotary(N, hd, base)

    def ln(t, w, b, eps=1e-5):
        mu = jnp.mean(t, -1, keepdims=True)
        var = jnp.mean((t - mu) ** 2, -1, keepdims=True)
        return (t - mu) * lax.rsqrt(var + eps) * w + b

    def rope(t):  # (B, H, N, hd)
        t1, t2 = t[..., : hd // 2], t[..., hd // 2:]
        rot = jnp.concatenate([-t2, t1], -1)
        return t * cos + rot * sin

    hp = lax.Precision.HIGHEST
    xn = ln(x, params["ln1_w"], params["ln1_b"])
    q = jnp.dot(xn, params["wq"], precision=hp).reshape(B, N, num_heads, hd).transpose(0, 2, 1, 3)
    k = jnp.dot(xn, params["wk"], precision=hp).reshape(B, N, num_heads, hd).transpose(0, 2, 1, 3)
    v = jnp.dot(xn, params["wv"], precision=hp).reshape(B, N, num_heads, hd).transpose(0, 2, 1, 3)
    qr, kr = rope(q), rope(k)
    s = jnp.einsum("bhnd,bhmd->bhnm", qr, kr, precision=hp) / math.sqrt(hd)
    mask = jnp.tril(jnp.ones((N, N), bool))
    s = jnp.where(mask, s, -1e30)
    p = jax.nn.softmax(s, -1)
    o = jnp.einsum("bhnm,bhmd->bhnd", p, v, precision=hp)
    o = o.transpose(0, 2, 1, 3).reshape(B, N, D)
    attn = jnp.dot(o, params["wo"], precision=hp)
    x1 = x + attn
    xn2 = ln(x1, params["ln2_w"], params["ln2_b"])
    u = jnp.dot(xn2, params["w1"], precision=hp)
    g = jnp.dot(xn2, params["w2"], precision=hp)
    ff = jnp.dot(jax.nn.silu(u) * g, params["w3"], precision=hp)
    return x1 + ff, (kr, v)


if __name__ == "__main__":
    # Small but tiling-exercising shapes: 2 q-tiles x 2 kv-tiles (exercises the
    # clamped-DMA / diagonal / interior paths), head_dim = 128.
    B, N, D, H, MID = 2, 256, 256, 2, 512
    key = jax.random.PRNGKey(0)
    kx, kp = jax.random.split(key)
    x = jax.random.normal(kx, (B, N, D), jnp.float32)
    params = init_params(kp, D, MID)

    out, (k_new, v_new) = transformer_layer(x, params, num_heads=H, tq=128, tk=128)
    jax.block_until_ready((out, k_new, v_new))

    ref_out, (ref_k, ref_v) = reference(x, params, num_heads=H)
    assert jnp.allclose(out, ref_out, atol=2e-2, rtol=2e-2), "output mismatch"
    assert jnp.allclose(k_new.astype(jnp.float32), ref_k, atol=2e-2, rtol=2e-2), "k cache mismatch"
    assert jnp.allclose(v_new.astype(jnp.float32), ref_v, atol=2e-2, rtol=2e-2), "v cache mismatch"

    print("KERNEL_OK")
</pallas_src>

<mosaic_0001>
module attributes {stable_mosaic.version = 11 : i64} {
  func.func @qkv_rope_kernel(%arg0: i32, %arg1: i32, %arg2: memref<1x128x256xf32, #tpu.memory_space<vmem>>, %arg3: memref<1x256xf32, #tpu.memory_space<vmem>>, %arg4: memref<1x256xf32, #tpu.memory_space<vmem>>, %arg5: memref<256x768xbf16, #tpu.memory_space<vmem>>, %arg6: memref<128x128xf32, #tpu.memory_space<vmem>>, %arg7: memref<128x128xf32, #tpu.memory_space<vmem>>, %arg8: memref<1x128x256xbf16, #tpu.memory_space<vmem>>, %arg9: memref<1x128x256xbf16, #tpu.memory_space<vmem>>, %arg10: memref<1x128x256xbf16, #tpu.memory_space<vmem>>) attributes {dimension_semantics = [#tpu.dimension_semantics<parallel>, #tpu.dimension_semantics<parallel>], iteration_bounds = array<i64: 2, 2>, scalar_prefetch = 0 : i64, scratch_operands = 0 : i64, tpu.core_type = #tpu.core_type<tc>, window_params = [{transform_indices = @transform_0, window_bounds = array<i64: 1, 128, 256>}, {pipeline_mode = #tpu.pipeline_mode<synchronous>, transform_indices = @transform_1, window_bounds = array<i64: 1, 256>}, {pipeline_mode = #tpu.pipeline_mode<synchronous>, transform_indices = @transform_2, window_bounds = array<i64: 1, 256>}, {pipeline_mode = #tpu.pipeline_mode<synchronous>, transform_indices = @transform_3, window_bounds = array<i64: 256, 768>}, {transform_indices = @transform_4, window_bounds = array<i64: 128, 128>}, {transform_indices = @transform_5, window_bounds = array<i64: 128, 128>}, {transform_indices = @transform_6, window_bounds = array<i64: 1, 128, 256>}, {transform_indices = @transform_7, window_bounds = array<i64: 1, 128, 256>}, {transform_indices = @transform_8, window_bounds = array<i64: 1, 128, 256>}]} {
    %c0 = arith.constant 0 : index
    %c0_0 = arith.constant 0 : index
    %c0_1 = arith.constant 0 : index
    %0 = vector.load %arg2[%c0, %c0_0, %c0_1] : memref<1x128x256xf32, #tpu.memory_space<vmem>>, vector<1x128x256xf32>
    %1 = vector.shape_cast %0 : vector<1x128x256xf32> to vector<128x256xf32>
    %cst = arith.constant dense<0.000000e+00> : vector<128xf32>
    %2 = vector.multi_reduction <add>, %1, %cst [1] : vector<128x256xf32> to vector<128xf32>
    %3 = vector.shape_cast %2 : vector<128xf32> to vector<128x1xf32>
    %cst_2 = arith.constant 2.560000e+02 : f32
    %4 = vector.broadcast %cst_2 : f32 to vector<128x1xf32>
    %5 = arith.divf %3, %4 : vector<128x1xf32>
    %6 = vector.broadcast %5 : vector<128x1xf32> to vector<128x256xf32>
    %7 = arith.subf %1, %6 : vector<128x256xf32>
    %8 = arith.mulf %7, %7 : vector<128x256xf32>
    %cst_3 = arith.constant dense<0.000000e+00> : vector<128xf32>
    %9 = vector.multi_reduction <add>, %8, %cst_3 [1] : vector<128x256xf32> to vector<128xf32>
    %10 = vector.shape_cast %9 : vector<128xf32> to vector<128x1xf32>
    %cst_4 = arith.constant 2.560000e+02 : f32
    %11 = vector.broadcast %cst_4 : f32 to vector<128x1xf32>
    %12 = arith.divf %10, %11 : vector<128x1xf32>
    %13 = vector.broadcast %5 : vector<128x1xf32> to vector<128x256xf32>
    %14 = arith.subf %1, %13 : vector<128x256xf32>
    %cst_5 = arith.constant 9.99999974E-6 : f32
    %15 = vector.broadcast %cst_5 : f32 to vector<128x1xf32>
    %16 = arith.addf %12, %15 : vector<128x1xf32>
    %17 = math.rsqrt %16 : vector<128x1xf32>
    %18 = vector.broadcast %17 : vector<128x1xf32> to vector<128x256xf32>
    %19 = arith.mulf %14, %18 : vector<128x256xf32>
    %c0_6 = arith.constant 0 : index
    %c0_7 = arith.constant 0 : index
    %20 = vector.load %arg3[%c0_6, %c0_7] : memref<1x256xf32, #tpu.memory_space<vmem>>, vector<1x256xf32>
    %21 = vector.broadcast %20 : vector<1x256xf32> to vector<128x256xf32>
    %22 = arith.mulf %19, %21 : vector<128x256xf32>
    %c0_8 = arith.constant 0 : index
    %c0_9 = arith.constant 0 : index
    %23 = vector.load %arg4[%c0_8, %c0_9] : memref<1x256xf32, #tpu.memory_space<vmem>>, vector<1x256xf32>
    %24 = vector.broadcast %23 : vector<1x256xf32> to vector<128x256xf32>
    %25 = arith.addf %22, %24 : vector<128x256xf32>
    %26 = arith.truncf %25 : vector<128x256xf32> to vector<128x256xbf16>
    %c0_10 = arith.constant 0 : index
    %c0_11 = arith.constant 0 : index
    %27 = vector.load %arg5[%c0_10, %c0_11] : memref<256x768xbf16, #tpu.memory_space<vmem>>, vector<256x768xbf16>
    %cst_12 = arith.constant dense<0.000000e+00> : vector<128x768xf32>
    %28 = tpu.matmul %26, %27, %cst_12 {dimension_numbers = #tpu.dot_dimension_numbers<[1], [0], [0], [1], [0, 0, 1, 1], [], []>} : vector<128x256xbf16>, vector<256x768xbf16>, vector<128x768xf32> -> vector<128x768xf32>
    %29 = vector.extract_strided_slice %28 {offsets = [0, 0], sizes = [128, 256], strides = [1, 1]} : vector<128x768xf32> to vector<128x256xf32>
    %30 = vector.extract_strided_slice %28 {offsets = [0, 256], sizes = [128, 256], strides = [1, 1]} : vector<128x768xf32> to vector<128x256xf32>
    %31 = vector.extract_strided_slice %28 {offsets = [0, 512], sizes = [128, 256], strides = [1, 1]} : vector<128x768xf32> to vector<128x256xf32>
    %c0_13 = arith.constant 0 : index
    %c0_14 = arith.constant 0 : index
    %32 = vector.load %arg6[%c0_13, %c0_14] : memref<128x128xf32, #tpu.memory_space<vmem>>, vector<128x128xf32>
    %c0_15 = arith.constant 0 : index
    %c0_16 = arith.constant 0 : index
    %33 = vector.load %arg7[%c0_15, %c0_16] : memref<128x128xf32, #tpu.memory_space<vmem>>, vector<128x128xf32>
    %34 = vector.extract_strided_slice %29 {offsets = [0, 0], sizes = [128, 128], strides = [1, 1]} : vector<128x256xf32> to vector<128x128xf32>
    %35 = vector.extract_strided_slice %30 {offsets = [0, 0], sizes = [128, 128], strides = [1, 1]} : vector<128x256xf32> to vector<128x128xf32>
    %36 = vector.extract_strided_slice %34 {offsets = [0, 64], sizes = [128, 64], strides = [1, 1]} : vector<128x128xf32> to vector<128x64xf32>
    %cst_17 = arith.constant 0.000000e+00 : f32
    %37 = vector.broadcast %cst_17 : f32 to vector<128x64xf32>
    %38 = arith.subf %37, %36 : vector<128x64xf32>
    %39 = vector.extract_strided_slice %34 {offsets = [0, 0], sizes = [128, 64], strides = [1, 1]} : vector<128x128xf32> to vector<128x64xf32>
    %40 = tpu.concatenate %38, %39 in 1 : vector<128x64xf32>, vector<128x64xf32> -> vector<128x128xf32>
    %41 = vector.extract_strided_slice %35 {offsets = [0, 64], sizes = [128, 64], strides = [1, 1]} : vector<128x128xf32> to vector<128x64xf32>
    %cst_18 = arith.constant 0.000000e+00 : f32
    %42 = vector.broadcast %cst_18 : f32 to vector<128x64xf32>
    %43 = arith.subf %42, %41 : vector<128x64xf32>
    %44 = vector.extract_strided_slice %35 {offsets = [0, 0], sizes = [128, 64], strides = [1, 1]} : vector<128x128xf32> to vector<128x64xf32>
    %45 = tpu.concatenate %43, %44 in 1 : vector<128x64xf32>, vector<128x64xf32> -> vector<128x128xf32>
    %46 = arith.mulf %34, %32 : vector<128x128xf32>
    %47 = arith.mulf %40, %33 : vector<128x128xf32>
    %48 = arith.addf %46, %47 : vector<128x128xf32>
    %49 = arith.truncf %48 : vector<128x128xf32> to vector<128x128xbf16>
    %c0_19 = arith.constant 0 : index
    %c0_20 = arith.constant 0 : index
    %c0_21 = arith.constant 0 : index
    %50 = vector.load %arg8[%c0_19, %c0_20, %c0_21] : memref<1x128x256xbf16, #tpu.memory_space<vmem>>, vector<1x128x128xbf16>
    %51 = vector.shape_cast %50 : vector<1x128x128xbf16> to vector<128x128xbf16>
    %52 = vector.shape_cast %49 : vector<128x128xbf16> to vector<1x128x128xbf16>
    tpu.vector_store %arg8[%c0_19, %c0_20, %c0_21], %52 {strides = array<i32>} : memref<1x128x256xbf16, #tpu.memory_space<vmem>>, vector<1x128x128xbf16>,
    %53 = arith.mulf %35, %32 : vector<128x128xf32>
    %54 = arith.mulf %45, %33 : vector<128x128xf32>
    %55 = arith.addf %53, %54 : vector<128x128xf32>
    %56 = arith.truncf %55 : vector<128x128xf32> to vector<128x128xbf16>
    %c0_22 = arith.constant 0 : index
    %c0_23 = arith.constant 0 : index
    %c0_24 = arith.constant 0 : index
    %57 = vector.load %arg9[%c0_22, %c0_23, %c0_24] : memref<1x128x256xbf16, #tpu.memory_space<vmem>>, vector<1x128x128xbf16>
    %58 = vector.shape_cast %57 : vector<1x128x128xbf16> to vector<128x128xbf16>
    %59 = vector.shape_cast %56 : vector<128x128xbf16> to vector<1x128x128xbf16>
    tpu.vector_store %arg9[%c0_22, %c0_23, %c0_24], %59 {strides = array<i32>} : memref<1x128x256xbf16, #tpu.memory_space<vmem>>, vector<1x128x128xbf16>,
    %60 = vector.extract_strided_slice %29 {offsets = [0, 128], sizes = [128, 128], strides = [1, 1]} : vector<128x256xf32> to vector<128x128xf32>
    %61 = vector.extract_strided_slice %30 {offsets = [0, 128], sizes = [128, 128], strides = [1, 1]} : vector<128x256xf32> to vector<128x128xf32>
    %62 = vector.extract_strided_slice %60 {offsets = [0, 64], sizes = [128, 64], strides = [1, 1]} : vector<128x128xf32> to vector<128x64xf32>
    %cst_25 = arith.constant 0.000000e+00 : f32
    %63 = vector.broadcast %cst_25 : f32 to vector<128x64xf32>
    %64 = arith.subf %63, %62 : vector<128x64xf32>
    %65 = vector.extract_strided_slice %60 {offsets = [0, 0], sizes = [128, 64], strides = [1, 1]} : vector<128x128xf32> to vector<128x64xf32>
    %66 = tpu.concatenate %64, %65 in 1 : vector<128x64xf32>, vector<128x64xf32> -> vector<128x128xf32>
    %67 = vector.extract_strided_slice %61 {offsets = [0, 64], sizes = [128, 64], strides = [1, 1]} : vector<128x128xf32> to vector<128x64xf32>
    %cst_26 = arith.constant 0.000000e+00 : f32
    %68 = vector.broadcast %cst_26 : f32 to vector<128x64xf32>
    %69 = arith.subf %68, %67 : vector<128x64xf32>
    %70 = vector.extract_strided_slice %61 {offsets = [0, 0], sizes = [128, 64], strides = [1, 1]} : vector<128x128xf32> to vector<128x64xf32>
    %71 = tpu.concatenate %69, %70 in 1 : vector<128x64xf32>, vector<128x64xf32> -> vector<128x128xf32>
    %72 = arith.mulf %60, %32 : vector<128x128xf32>
    %73 = arith.mulf %66, %33 : vector<128x128xf32>
    %74 = arith.addf %72, %73 : vector<128x128xf32>
    %75 = arith.truncf %74 : vector<128x128xf32> to vector<128x128xbf16>
    %c0_27 = arith.constant 0 : index
    %c0_28 = arith.constant 0 : index
    %c128 = arith.constant 128 : index
    %76 = vector.load %arg8[%c0_27, %c0_28, %c128] : memref<1x128x256xbf16, #tpu.memory_space<vmem>>, vector<1x128x128xbf16>
    %77 = vector.shape_cast %76 : vector<1x128x128xbf16> to vector<128x128xbf16>
    %78 = vector.shape_cast %75 : vector<128x128xbf16> to vector<1x128x128xbf16>
    tpu.vector_store %arg8[%c0_27, %c0_28, %c128], %78 {strides = array<i32>} : memref<1x128x256xbf16, #tpu.memory_space<vmem>>, vector<1x128x128xbf16>,
    %79 = arith.mulf %61, %32 : vector<128x128xf32>
    %80 = arith.mulf %71, %33 : vector<128x128xf32>
    %81 = arith.addf %79, %80 : vector<128x128xf32>
    %82 = arith.truncf %81 : vector<128x128xf32> to vector<128x128xbf16>
    %c0_29 = arith.constant 0 : index
    %c0_30 = arith.constant 0 : index
    %c128_31 = arith.constant 128 : index
    %83 = vector.load %arg9[%c0_29, %c0_30, %c128_31] : memref<1x128x256xbf16, #tpu.memory_space<vmem>>, vector<1x128x128xbf16>
    %84 = vector.shape_cast %83 : vector<1x128x128xbf16> to vector<128x128xbf16>
    %85 = vector.shape_cast %82 : vector<128x128xbf16> to vector<1x128x128xbf16>
    tpu.vector_store %arg9[%c0_29, %c0_30, %c128_31], %85 {strides = array<i32>} : memref<1x128x256xbf16, #tpu.memory_space<vmem>>, vector<1x128x128xbf16>,
    %86 = arith.truncf %31 : vector<128x256xf32> to vector<128x256xbf16>
    %c0_32 = arith.constant 0 : index
    %c0_33 = arith.constant 0 : index
    %c0_34 = arith.constant 0 : index
    %87 = vector.load %arg10[%c0_32, %c0_33, %c0_34] : memref<1x128x256xbf16, #tpu.memory_space<vmem>>, vector<1x128x256xbf16>
    %88 = vector.shape_cast %87 : vector<1x128x256xbf16> to vector<128x256xbf16>
    %89 = vector.shape_cast %86 : vector<128x256xbf16> to vector<1x128x256xbf16>
    tpu.vector_store %arg10[%c0_32, %c0_33, %c0_34], %89 {strides = array<i32>} : memref<1x128x256xbf16, #tpu.memory_space<vmem>>, vector<1x128x256xbf16>,
    return
  }
  func.func @transform_0(%arg0: i32, %arg1: i32) -> (i32, i32, i32) {
    %c0_i32 = arith.constant 0 : i32
    %c0_i32_0 = arith.constant 0 : i32
    return %arg0, %arg1, %c0_i32 : i32, i32, i32
  }
  func.func @transform_1(%arg0: i32, %arg1: i32) -> (i32, i32) {
    %c0_i32 = arith.constant 0 : i32
    %c0_i32_0 = arith.constant 0 : i32
    %c0_i32_1 = arith.constant 0 : i32
    return %c0_i32, %c0_i32_0 : i32, i32
  }
  func.func @transform_2(%arg0: i32, %arg1: i32) -> (i32, i32) {
    %c0_i32 = arith.constant 0 : i32
    %c0_i32_0 = arith.constant 0 : i32
    %c0_i32_1 = arith.constant 0 : i32
    return %c0_i32, %c0_i32_0 : i32, i32
  }
  func.func @transform_3(%arg0: i32, %arg1: i32) -> (i32, i32) {
    %c0_i32 = arith.constant 0 : i32
    %c0_i32_0 = arith.constant 0 : i32
    %c0_i32_1 = arith.constant 0 : i32
    return %c0_i32, %c0_i32_0 : i32, i32
  }
  func.func @transform_4(%arg0: i32, %arg1: i32) -> (i32, i32) {
    %c0_i32 = arith.constant 0 : i32
    %c0_i32_0 = arith.constant 0 : i32
    return %arg1, %c0_i32 : i32, i32
  }
  func.func @transform_5(%arg0: i32, %arg1: i32) -> (i32, i32) {
    %c0_i32 = arith.constant 0 : i32
    %c0_i32_0 = arith.constant 0 : i32
    return %arg1, %c0_i32 : i32, i32
  }
  func.func @transform_6(%arg0: i32, %arg1: i32) -> (i32, i32, i32) {
    %c0_i32 = arith.constant 0 : i32
    %c0_i32_0 = arith.constant 0 : i32
    return %arg0, %arg1, %c0_i32 : i32, i32, i32
  }
  func.func @transform_7(%arg0: i32, %arg1: i32) -> (i32, i32, i32) {
    %c0_i32 = arith.constant 0 : i32
    %c0_i32_0 = arith.constant 0 : i32
    return %arg0, %arg1, %c0_i32 : i32, i32, i32
  }
  func.func @transform_8(%arg0: i32, %arg1: i32) -> (i32, i32, i32) {
    %c0_i32 = arith.constant 0 : i32
    %c0_i32_0 = arith.constant 0 : i32
    return %arg0, %arg1, %c0_i32 : i32, i32, i32
  }
}

</mosaic_0001>

<llo_original>
// kernel: tpu_custom_call.1
$region0: #{tpu_custom_call.1}
  #allocation0 [shape = 'u32[]', space=smem, size = 0x4, offset = 0x4, fixed_abs, tag = 'smem constant byte address 0x4 - core index']
  #allocation1 [shape = 'u32[144,128]{1,0:T(1,128)}', space=vmem, size = 0x12000, scoped, tag = 'internal scratch']
  %s0 = inlined_call_operand.hbm [shape: f32[2,256,256], index: 0, kind: input, shape index: {}]
  %s1 = inlined_call_operand.hbm [shape: f32[1,256], index: 1, kind: input, shape index: {}]
  %s2 = inlined_call_operand.hbm [shape: f32[1,256], index: 2, kind: input, shape index: {}]
  %s3 = inlined_call_operand.hbm [shape: bf16[256,768], index: 3, kind: input, shape index: {}]
  %s4 = inlined_call_operand.hbm [shape: f32[256,128], index: 4, kind: input, shape index: {}]
  %s5 = inlined_call_operand.hbm [shape: f32[256,128], index: 5, kind: input, shape index: {}]
  %s6 = inlined_call_operand.hbm [shape: bf16[2,256,256], index: 6, kind: output, shape index: {0}]
  %s7 = inlined_call_operand.hbm [shape: bf16[2,256,256], index: 7, kind: output, shape index: {1}]
  %s8 = inlined_call_operand.hbm [shape: bf16[2,256,256], index: 8, kind: output, shape index: {2}]
  %9 = xla_tuple %s6, %s7, %s8
  %s10 = sld [smem:[#allocation0]]
  $region97: #{tpu_custom_call.1} parent=0
    _
  %s12 = ssub.s32 1, %s10
  %s13 = scalar_select 0, %s12, %s10
  $region1: #{tpu_custom_call.1} parent=0
    #allocation2 [shape = 'u8[262144]{0}', space=vmem, size = 0x40000, scoped, tag = 'input window, operand 0']
    #allocation3 [shape = 's32[2]{0}', space=sflag, size = 0x8, scoped, tag = 'scoped memory for tpu_custom_call.1']
    #allocation4 [shape = 's32[2]{0}', space=sflag, size = 0x8, scoped, tag = 'scoped memory for tpu_custom_call.1']
    #allocation5 [shape = 'u8[1024]{0}', space=vmem, size = 0x400, scoped, tag = 'input window, operand 1, single buffered']
    #allocation6 [shape = 's32[1]{0}', space=sflag, size = 0x4, scoped, tag = 'scoped memory for tpu_custom_call.1']
    #allocation7 [shape = 'u8[1024]{0}', space=vmem, size = 0x400, scoped, tag = 'input window, operand 2, single buffered']
    #allocation8 [shape = 'u8[393216]{0}', space=vmem, size = 0x60000, scoped, tag = 'input window, operand 3, single buffered']
    #allocation9 [shape = 's32[1]{0}', space=sflag, size = 0x4, scoped, tag = 'scoped memory for tpu_custom_call.1']
    #allocation10 [shape = 'u8[131072]{0}', space=vmem, size = 0x20000, scoped, tag = 'input window, operand 4']
    #allocation11 [shape = 'u8[131072]{0}', space=vmem, size = 0x20000, scoped, tag = 'input window, operand 5']
    #allocation12 [shape = 'u8[131072]{0}', space=vmem, size = 0x20000, scoped, tag = 'output window, operand 0']
    #allocation13 [shape = 'u8[131072]{0}', space=vmem, size = 0x20000, scoped, tag = 'output window, operand 1']
    #allocation14 [shape = 's32[2]{0}', space=sflag, size = 0x8, scoped, tag = 'scoped memory for tpu_custom_call.1']
    #allocation15 [shape = 'u8[131072]{0}', space=vmem, size = 0x20000, scoped, tag = 'output window, operand 2']
    %14 = vsyncpa [#allocation3], 0
    %s15 = scalar_lea.sflag [#allocation3], 1
    %16 = vsyncpa %s15, 0
    %17 = vsyncpa [#allocation6], 0
    %18 = vsyncpa [#allocation9], 0
    %19 = vsyncpa [#allocation4], 0
    %s20 = scalar_lea.sflag [#allocation4], 1
    %21 = vsyncpa %s20, 0
    %22 = vsyncpa [#allocation14], 0
    %s23 = scalar_lea.sflag [#allocation14], 1
    %24 = vsyncpa %s23, 0
    loop: start=0, step=1, limit=6
    $region2: #{tpu_custom_call.1} parent=1 // loop_pre_header
      _
    $region3: #{tpu_custom_call.1} parent=1 // loop_header
      %s26 = sphi 0, %s30
      %p27 = scmp.ge.s32.totalorder %s26, 6
      %s33 = sphi 0, %s45
      %s34 = sphi 0, %s41
      %s35 = sphi 0, %s33
      %s36 = sphi 0, %s34
      %s37 = sphi 0, %s35
      %s38 = sphi 0, %s36
      %s50 = sphi 0, %s52
      %s53 = sphi 0, %s50
      %s54 = sphi 0, %s53
      %s70 = sphi 0, %s54
      %s74 = sphi 0, %s74
      %s76 = sphi 0, %s74
      %s77 = sphi 0, %s76
      %s91 = sphi 0, %s77
      %s95 = sphi 0, %s95
      %s97 = sphi 0, %s95
      %s98 = sphi 0, %s97
      %s112 = sphi 0, %s98
      %s116 = sphi 0, %s116
      %s118 = sphi 0, %s116
      %s119 = sphi 0, %s118
      %s133 = sphi 0, %s119
      %s139 = sphi 0, %s141
      %s142 = sphi 0, %s139
      %s143 = sphi 0, %s142
      %s159 = sphi 0, %s143
      %s165 = sphi 0, %s167
      %s168 = sphi 0, %s165
      %s169 = sphi 0, %s168
      %s185 = sphi 0, %s169
      %s193 = sphi 0, %s195
      %s196 = sphi 0, %s193
      %s197 = sphi 0, %s196
      %s213 = sphi 0, %s197
      %s221 = sphi 0, %s223
      %s224 = sphi 0, %s221
      %s225 = sphi 0, %s224
      %s241 = sphi 0, %s225
      %s249 = sphi 0, %s251
      %s252 = sphi 0, %s249
      %s253 = sphi 0, %s252
      %s269 = sphi 0, %s253
    $region4: #{tpu_custom_call.1} parent=1 // loop_header_branch
      %29 = sbr.rel (%p27) target = $region8
    $region5: #{tpu_custom_call.1} parent=1 // loop_body
      %s31 = ssub.s32 %s26, 1
      %s32 = ssub.s32 %s26, 2
      %s39 = sadd.s32 1, %s34
      %p40 = scmp.ge.s32.totalorder %s39, 2
      %s41 = scalar_select %p40, 0, %s39
      %s42 = sadd.s32 1, %s33
      %s43 = scalar_select %p40, %s42, %s33
      %p44 = scmp.ge.s32.totalorder %s43, 2
      %s45 = scalar_select %p44, 0, %s43
      %s46 = ssub.s32 %s33, %s45
      %s47 = ssub.s32 %s34, %s41
      %s48 = sor.u32 %s46, %s47
      %p49 = scmp.eq.s32.totalorder %s48, 0
      %s51 = sadd.s32 %s50, 1
      %s52 = scalar_select %p49, %s50, %s51
      %p55 = pneg %p49
      %p56 = scmp.eq.s32.totalorder %s26, 3
      %p57 = por %p55, %p56
      %p58 = scmp.ne.s32.totalorder %s50, %s53
      %p59 = scmp.eq.s32.totalorder %s26, 0
      %p60 = por %p58, %p59
      %p61 = scmp.ne.s32.totalorder %s50, %s53
      %p62 = scmp.eq.s32.totalorder %s31, 3
      %p63 = por %p61, %p62
      %p64 = scmp.ne.s32.totalorder %s53, %s54
      %p65 = scmp.eq.s32.totalorder %s31, 0
      %p66 = por %p64, %p65
      %p67 = scmp.ne.s32.totalorder %s53, %s54
      %p68 = scmp.eq.s32.totalorder %s32, 3
      %p69 = por %p67, %p68
      %p71 = scmp.ne.s32.totalorder %s54, %s70
      %p72 = scmp.eq.s32.totalorder %s32, 0
      %p73 = por %p71, %p72
      %s75 = sadd.s32 %s74, 1
      %p78 = scmp.eq.s32.totalorder %s26, 3
      %p79 = scmp.ne.s32.totalorder %s74, %s76
      %p80 = scmp.eq.s32.totalorder %s26, 0
      %p81 = por %p79, %p80
      %p82 = scmp.ne.s32.totalorder %s74, %s76
      %p83 = scmp.eq.s32.totalorder %s31, 3
      %p84 = por %p82, %p83
      %p85 = scmp.ne.s32.totalorder %s76, %s77
      %p86 = scmp.eq.s32.totalorder %s31, 0
      %p87 = por %p85, %p86
      %p88 = scmp.ne.s32.totalorder %s76, %s77
      %p89 = scmp.eq.s32.totalorder %s32, 3
      %p90 = por %p88, %p89
      %p92 = scmp.ne.s32.totalorder %s77, %s91
      %p93 = scmp.eq.s32.totalorder %s32, 0
      %p94 = por %p92, %p93
      %s96 = sadd.s32 %s95, 1
      %p99 = scmp.eq.s32.totalorder %s26, 3
      %p100 = scmp.ne.s32.totalorder %s95, %s97
      %p101 = scmp.eq.s32.totalorder %s26, 0
      %p102 = por %p100, %p101
      %p103 = scmp.ne.s32.totalorder %s95, %s97
      %p104 = scmp.eq.s32.totalorder %s31, 3
      %p105 = por %p103, %p104
      %p106 = scmp.ne.s32.totalorder %s97, %s98
      %p107 = scmp.eq.s32.totalorder %s31, 0
      %p108 = por %p106, %p107
      %p109 = scmp.ne.s32.totalorder %s97, %s98
      %p110 = scmp.eq.s32.totalorder %s32, 3
      %p111 = por %p109, %p110
      %p113 = scmp.ne.s32.totalorder %s98, %s112
      %p114 = scmp.eq.s32.totalorder %s32, 0
      %p115 = por %p113, %p114
      %s117 = sadd.s32 %s116, 1
      %p120 = scmp.eq.s32.totalorder %s26, 3
      %p121 = scmp.ne.s32.totalorder %s116, %s118
      %p122 = scmp.eq.s32.totalorder %s26, 0
      %p123 = por %p121, %p122
      %p124 = scmp.ne.s32.totalorder %s116, %s118
      %p125 = scmp.eq.s32.totalorder %s31, 3
      %p126 = por %p124, %p125
      %p127 = scmp.ne.s32.totalorder %s118, %s119
      %p128 = scmp.eq.s32.totalorder %s31, 0
      %p129 = por %p127, %p128
      %p130 = scmp.ne.s32.totalorder %s118, %s119
      %p131 = scmp.eq.s32.totalorder %s32, 3
      %p132 = por %p130, %p131
      %p134 = scmp.ne.s32.totalorder %s119, %s133
      %p135 = scmp.eq.s32.totalorder %s32, 0
      %p136 = por %p134, %p135
      %s137 = ssub.s32 %s34, %s41
      %p138 = scmp.eq.s32.totalorder %s137, 0
      %s140 = sadd.s32 %s139, 1
      %s141 = scalar_select %p138, %s139, %s140
      %p144 = pneg %p138
      %p145 = scmp.eq.s32.totalorder %s26, 3
      %p146 = por %p144, %p145
      %p147 = scmp.ne.s32.totalorder %s139, %s142
      %p148 = scmp.eq.s32.totalorder %s26, 0
      %p149 = por %p147, %p148
      %p150 = scmp.ne.s32.totalorder %s139, %s142
      %p151 = scmp.eq.s32.totalorder %s31, 3
      %p152 = por %p150, %p151
      %p153 = scmp.ne.s32.totalorder %s142, %s143
      %p154 = scmp.eq.s32.totalorder %s31, 0
      %p155 = por %p153, %p154
      %p156 = scmp.ne.s32.totalorder %s142, %s143
      %p157 = scmp.eq.s32.totalorder %s32, 3
      %p158 = por %p156, %p157
      %p160 = scmp.ne.s32.totalorder %s143, %s159
      %p161 = scmp.eq.s32.totalorder %s32, 0
      %p162 = por %p160, %p161
      %s163 = ssub.s32 %s34, %s41
      %p164 = scmp.eq.s32.totalorder %s163, 0
      %s166 = sadd.s32 %s165, 1
      %s167 = scalar_select %p164, %s165, %s166
      %p170 = pneg %p164
      %p171 = scmp.eq.s32.totalorder %s26, 3
      %p172 = por %p170, %p171
      %p173 = scmp.ne.s32.totalorder %s165, %s168
      %p174 = scmp.eq.s32.totalorder %s26, 0
      %p175 = por %p173, %p174
      %p176 = scmp.ne.s32.totalorder %s165, %s168
      %p177 = scmp.eq.s32.totalorder %s31, 3
      %p178 = por %p176, %p177
      %p179 = scmp.ne.s32.totalorder %s168, %s169
      %p180 = scmp.eq.s32.totalorder %s31, 0
      %p181 = por %p179, %p180
      %p182 = scmp.ne.s32.totalorder %s168, %s169
      %p183 = scmp.eq.s32.totalorder %s32, 3
      %p184 = por %p182, %p183
      %p186 = scmp.ne.s32.totalorder %s169, %s185
      %p187 = scmp.eq.s32.totalorder %s32, 0
      %p188 = por %p186, %p187
      %s189 = ssub.s32 %s33, %s45
      %s190 = ssub.s32 %s34, %s41
      %s191 = sor.u32 %s189, %s190
      %p192 = scmp.eq.s32.totalorder %s191, 0
      %s194 = sadd.s32 %s193, 1
      %s195 = scalar_select %p192, %s193, %s194
      %p198 = pneg %p192
      %p199 = scmp.eq.s32.totalorder %s26, 3
      %p200 = por %p198, %p199
      %p201 = scmp.ne.s32.totalorder %s193, %s196
      %p202 = scmp.eq.s32.totalorder %s26, 0
      %p203 = por %p201, %p202
      %p204 = scmp.ne.s32.totalorder %s193, %s196
      %p205 = scmp.eq.s32.totalorder %s31, 3
      %p206 = por %p204, %p205
      %p207 = scmp.ne.s32.totalorder %s196, %s197
      %p208 = scmp.eq.s32.totalorder %s31, 0
      %p209 = por %p207, %p208
      %p210 = scmp.ne.s32.totalorder %s196, %s197
      %p211 = scmp.eq.s32.totalorder %s32, 3
      %p212 = por %p210, %p211
      %p214 = scmp.ne.s32.totalorder %s197, %s213
      %p215 = scmp.eq.s32.totalorder %s32, 0
      %p216 = por %p214, %p215
      %s217 = ssub.s32 %s33, %s45
      %s218 = ssub.s32 %s34, %s41
      %s219 = sor.u32 %s217, %s218
      %p220 = scmp.eq.s32.totalorder %s219, 0
      %s222 = sadd.s32 %s221, 1
      %s223 = scalar_select %p220, %s221, %s222
      %p226 = pneg %p220
      %p227 = scmp.eq.s32.totalorder %s26, 3
      %p228 = por %p226, %p227
      %p229 = scmp.ne.s32.totalorder %s221, %s224
      %p230 = scmp.eq.s32.totalorder %s26, 0
      %p231 = por %p229, %p230
      %p232 = scmp.ne.s32.totalorder %s221, %s224
      %p233 = scmp.eq.s32.totalorder %s31, 3
      %p234 = por %p232, %p233
      %p235 = scmp.ne.s32.totalorder %s224, %s225
      %p236 = scmp.eq.s32.totalorder %s31, 0
      %p237 = por %p235, %p236
      %p238 = scmp.ne.s32.totalorder %s224, %s225
      %p239 = scmp.eq.s32.totalorder %s32, 3
      %p240 = por %p238, %p239
      %p242 = scmp.ne.s32.totalorder %s225, %s241
      %p243 = scmp.eq.s32.totalorder %s32, 0
      %p244 = por %p242, %p243
      %s245 = ssub.s32 %s33, %s45
      %s246 = ssub.s32 %s34, %s41
      %s247 = sor.u32 %s245, %s246
      %p248 = scmp.eq.s32.totalorder %s247, 0
      %s250 = sadd.s32 %s249, 1
      %s251 = scalar_select %p248, %s249, %s250
      %p254 = pneg %p248
      %p255 = scmp.eq.s32.totalorder %s26, 3
      %p256 = por %p254, %p255
      %p257 = scmp.ne.s32.totalorder %s249, %s252
      %p258 = scmp.eq.s32.totalorder %s26, 0
      %p259 = por %p257, %p258
      %p260 = scmp.ne.s32.totalorder %s249, %s252
      %p261 = scmp.eq.s32.totalorder %s31, 3
      %p262 = por %p260, %p261
      %p263 = scmp.ne.s32.totalorder %s252, %s253
      %p264 = scmp.eq.s32.totalorder %s31, 0
      %p265 = por %p263, %p264
      %p266 = scmp.ne.s32.totalorder %s252, %s253
      %p267 = scmp.eq.s32.totalorder %s32, 3
      %p268 = por %p266, %p267
      %p270 = scmp.ne.s32.totalorder %s253, %s269
      %p271 = scmp.eq.s32.totalorder %s32, 0
      %p272 = por %p270, %p271
      %p273 = scmp.le.s32.totalorder 1, %s26
      %p274 = scmp.lt.s32.totalorder %s26, 5
      %p275 = pnand %p273, %p274
      %p276 = pneg %p275
      // Predicated region
      $region9: #{tpu_custom_call.1} parent=5 // pred_check
        _
      $region10: #{tpu_custom_call.1} parent=5 // pred_check_branch
        %278 = sbr.rel (%p275) target = $region12
      $region11: #{tpu_custom_call.1} parent=5 // pred_region
        %s279 = ssub.s32 %s26, 1
        // Predicated region
        $region13: #{tpu_custom_call.1} parent=11 // pred_check
          %p280 = pneg %p87
        $region14: #{tpu_custom_call.1} parent=11 // pred_check_branch
          %282 = sbr.rel (%p280) target = $region16
        $region15: #{tpu_custom_call.1} parent=11 // pred_region
          %s284 = ssub.s32 32, 32
          %285 = vsyncadd [#allocation6], %s284
          %s287 = sshll.u32 [#allocation5], 4
          %s288 = int_to_ptr.vmem [resolvable:$true] %s287
          %290 = dma.hbm_to_vmem [thread:$0]  %s1, 32, %s288, [#allocation6]
        $region16: #{tpu_custom_call.1} parent=11 // pred_fallthru
          _
        // Predicated region
        $region17: #{tpu_custom_call.1} parent=11 // pred_check
          %p291 = pneg %p108
        $region18: #{tpu_custom_call.1} parent=11 // pred_check_branch
          %293 = sbr.rel (%p291) target = $region20
        $region19: #{tpu_custom_call.1} parent=11 // pred_region
          %s295 = ssub.s32 32, 32
          %296 = vsyncadd [#allocation6], %s295
          %s298 = sshll.u32 [#allocation7], 4
          %s299 = int_to_ptr.vmem [resolvable:$true] %s298
          %301 = dma.hbm_to_vmem [thread:$0]  %s2, 32, %s299, [#allocation6]
        $region20: #{tpu_custom_call.1} parent=11 // pred_fallthru
          _
        // Predicated region
        $region21: #{tpu_custom_call.1} parent=11 // pred_check
          %p302 = pneg %p129
        $region22: #{tpu_custom_call.1} parent=11 // pred_check_branch
          %304 = sbr.rel (%p302) target = $region24
        $region23: #{tpu_custom_call.1} parent=11 // pred_region
          %s306 = ssub.s32 12288, 12288
          %307 = vsyncadd [#allocation9], %s306
          %s308 = sshll.u32 [#allocation8], 4
          %s309 = int_to_ptr.vmem [resolvable:$true] %s308
          %314 = dma.hbm_to_vmem [thread:$0]  %s3, 12288, %s309, [#allocation9], 384, 384, 24
        $region24: #{tpu_custom_call.1} parent=11 // pred_fallthru
          _
      $region12: #{tpu_custom_call.1} parent=5 // pred_fallthru
        _
      %p315 = scmp.lt.s32.totalorder %s26, 4
      // Predicated region
      $region25: #{tpu_custom_call.1} parent=5 // pred_check
        %p316 = pneg %p315
      $region26: #{tpu_custom_call.1} parent=5 // pred_check_branch
        %318 = sbr.rel (%p316) target = $region28
      $region27: #{tpu_custom_call.1} parent=5 // pred_region
        // Predicated region
        $region29: #{tpu_custom_call.1} parent=27 // pred_check
          %p319 = pneg %p60
        $region30: #{tpu_custom_call.1} parent=27 // pred_check_branch
          %321 = sbr.rel (%p319) target = $region32
        $region31: #{tpu_custom_call.1} parent=27 // pred_region
          %s322 = sand.u32 %s26, 1
          %s323 = scalar_lea.sflag [#allocation3], %s322
          %s324 = sand.u32 %s50, 1
          %s325 = smul.addr %s324, 256
          %s326 = scalar_lea.vmem [#allocation2], %s325
          %s327 = smul.u32 16, %s34
          %s329 = ssub.s32 4096, 4096
          %330 = vsyncadd %s323, %s329
          %s331 = smul.addr %s327, 2
          %s332 = smul.addr %s33, 64
          %s333 = sadd.s32 %s331, %s332
          %s334 = smul.addr %s333, 128
          %s335 = scalar_lea.hbm %s0, %s334
          %s336 = sshll.u32 %s326, 4
          %s337 = int_to_ptr.vmem [resolvable:$true] %s336
          %342 = dma.hbm_to_vmem [thread:$0]  %s335, 4096, %s337, %s323, 256, 256, 16
        $region32: #{tpu_custom_call.1} parent=27 // pred_fallthru
          _
        // Predicated region
        $region33: #{tpu_custom_call.1} parent=27 // pred_check
          %p343 = pneg %p149
        $region34: #{tpu_custom_call.1} parent=27 // pred_check_branch
          %345 = sbr.rel (%p343) target = $region36
        $region35: #{tpu_custom_call.1} parent=27 // pred_region
          %s346 = sand.u32 %s26, 1
          %s347 = scalar_lea.sflag [#allocation3], %s346
          %s348 = sand.u32 %s139, 1
          %s349 = smul.addr %s348, 128
          %s350 = scalar_lea.vmem [#allocation10], %s349
          %s351 = smul.u32 16, %s34
          %s353 = ssub.s32 2048, 2048
          %354 = vsyncadd %s347, %s353
          %s355 = smul.addr %s351, 128
          %s356 = scalar_lea.hbm %s4, %s355
          %s357 = sshll.u32 %s350, 4
          %s358 = int_to_ptr.vmem [resolvable:$true] %s357
          %363 = dma.hbm_to_vmem [thread:$0]  %s356, 2048, %s358, %s347, 128, 128, 8
        $region36: #{tpu_custom_call.1} parent=27 // pred_fallthru
          _
        // Predicated region
        $region37: #{tpu_custom_call.1} parent=27 // pred_check
          %p364 = pneg %p175
        $region38: #{tpu_custom_call.1} parent=27 // pred_check_branch
          %366 = sbr.rel (%p364) target = $region40
        $region39: #{tpu_custom_call.1} parent=27 // pred_region
          %s367 = sand.u32 %s26, 1
          %s368 = scalar_lea.sflag [#allocation3], %s367
          %s369 = sand.u32 %s165, 1
          %s370 = smul.addr %s369, 128
          %s371 = scalar_lea.vmem [#allocation11], %s370
          %s372 = smul.u32 16, %s34
          %s374 = ssub.s32 2048, 2048
          %375 = vsyncadd %s368, %s374
          %s376 = smul.addr %s372, 128
          %s377 = scalar_lea.hbm %s5, %s376
          %s378 = sshll.u32 %s371, 4
          %s379 = int_to_ptr.vmem [resolvable:$true] %s378
          %384 = dma.hbm_to_vmem [thread:$0]  %s377, 2048, %s379, %s368, 128, 128, 8
        $region40: #{tpu_custom_call.1} parent=27 // pred_fallthru
          _
      $region28: #{tpu_custom_call.1} parent=5 // pred_fallthru
        _
      %p385 = scmp.le.s32.totalorder 1, %s26
      %p386 = scmp.lt.s32.totalorder %s26, 5
      %p387 = pnand %p385, %p386
      %p388 = pneg %p387
      // Predicated region
      $region41: #{tpu_custom_call.1} parent=5 // pred_check
        _
      $region42: #{tpu_custom_call.1} parent=5 // pred_check_branch
        %390 = sbr.rel (%p387) target = $region44
      $region43: #{tpu_custom_call.1} parent=5 // pred_region
        %s391 = ssub.s32 %s26, 1
        %s392 = sand.u32 %s31, 1
        %s393 = scalar_lea.sflag [#allocation3], %s392
        %s394 = sand.u32 %s53, 1
        %s395 = smul.addr %s394, 256
        %s396 = scalar_lea.vmem [#allocation2], %s395
        // Predicated region
        $region45: #{tpu_custom_call.1} parent=43 // pred_check
          %p397 = pneg %p66
        $region46: #{tpu_custom_call.1} parent=43 // pred_check_branch
          %399 = sbr.rel (%p397) target = $region48
        $region47: #{tpu_custom_call.1} parent=43 // pred_region
          %400 = dma.done %s393, 4096
        $region48: #{tpu_custom_call.1} parent=43 // pred_fallthru
          _
        // Predicated region
        $region49: #{tpu_custom_call.1} parent=43 // pred_check
          %p401 = pneg %p87
        $region50: #{tpu_custom_call.1} parent=43 // pred_check_branch
          %403 = sbr.rel (%p401) target = $region52
        $region51: #{tpu_custom_call.1} parent=43 // pred_region
          %404 = dma.done [#allocation6], 32
        $region52: #{tpu_custom_call.1} parent=43 // pred_fallthru
          _
        // Predicated region
        $region53: #{tpu_custom_call.1} parent=43 // pred_check
          %p405 = pneg %p108
        $region54: #{tpu_custom_call.1} parent=43 // pred_check_branch
          %407 = sbr.rel (%p405) target = $region56
        $region55: #{tpu_custom_call.1} parent=43 // pred_region
          %408 = dma.done [#allocation6], 32
        $region56: #{tpu_custom_call.1} parent=43 // pred_fallthru
          _
        // Predicated region
        $region57: #{tpu_custom_call.1} parent=43 // pred_check
          %p409 = pneg %p129
        $region58: #{tpu_custom_call.1} parent=43 // pred_check_branch
          %411 = sbr.rel (%p409) target = $region60
        $region59: #{tpu_custom_call.1} parent=43 // pred_region
          %412 = dma.done [#allocation9], 12288
        $region60: #{tpu_custom_call.1} parent=43 // pred_fallthru
          _
        %s413 = sand.u32 %s31, 1
        %s414 = scalar_lea.sflag [#allocation3], %s413
        %s415 = sand.u32 %s142, 1
        %s416 = smul.addr %s415, 128
        %s417 = scalar_lea.vmem [#allocation10], %s416
        // Predicated region
        $region61: #{tpu_custom_call.1} parent=43 // pred_check
          %p418 = pneg %p155
        $region62: #{tpu_custom_call.1} parent=43 // pred_check_branch
          %420 = sbr.rel (%p418) target = $region64
        $region63: #{tpu_custom_call.1} parent=43 // pred_region
          %421 = dma.done %s414, 2048
        $region64: #{tpu_custom_call.1} parent=43 // pred_fallthru
          _
        %s422 = sand.u32 %s31, 1
        %s423 = scalar_lea.sflag [#allocation3], %s422
        %s424 = sand.u32 %s168, 1
        %s425 = smul.addr %s424, 128
        %s426 = scalar_lea.vmem [#allocation11], %s425
        // Predicated region
        $region65: #{tpu_custom_call.1} parent=43 // pred_check
          %p427 = pneg %p181
        $region66: #{tpu_custom_call.1} parent=43 // pred_check_branch
          %429 = sbr.rel (%p427) target = $region68
        $region67: #{tpu_custom_call.1} parent=43 // pred_region
          %430 = dma.done %s423, 2048
        $region68: #{tpu_custom_call.1} parent=43 // pred_fallthru
          _
        %s431 = sand.u32 %s31, 1
        %s432 = scalar_lea.sflag [#allocation3], %s431
        %s433 = sand.u32 %s53, 1
        %s434 = smul.addr %s433, 256
        %s435 = scalar_lea.vmem [#allocation2], %s434
        %p436 = pneg %p66
        %p437 = pneg %p63
        %p438 = pneg %p87
        %p439 = pneg %p84
        %p440 = pneg %p108
        %p441 = pneg %p105
        %p442 = pneg %p129
        %p443 = pneg %p126
        %s444 = sand.u32 %s31, 1
        %s445 = scalar_lea.sflag [#allocation3], %s444
        %s446 = sand.u32 %s142, 1
        %s447 = smul.addr %s446, 128
        %s448 = scalar_lea.vmem [#allocation10], %s447
        %p449 = pneg %p155
        %p450 = pneg %p152
        %s451 = sand.u32 %s31, 1
        %s452 = scalar_lea.sflag [#allocation3], %s451
        %s453 = sand.u32 %s168, 1
        %s454 = smul.addr %s453, 128
        %s455 = scalar_lea.vmem [#allocation11], %s454
        %p456 = pneg %p181
        %p457 = pneg %p178
        %p458 = pneg %p209
        %p459 = pneg %p206
        %s460 = sand.u32 %s196, 1
        %s461 = scalar_lea.sflag [#allocation4], %s460
        %s462 = sand.u32 %s196, 1
        %s463 = smul.addr %s462, 128
        %s464 = scalar_lea.vmem [#allocation12], %s463
        %p465 = pneg %p237
        %p466 = pneg %p234
        %s467 = sand.u32 %s31, 1
        %s468 = scalar_lea.sflag [#allocation14], %s467
        %s469 = sand.u32 %s224, 1
        %s470 = smul.addr %s469, 128
        %s471 = scalar_lea.vmem [#allocation13], %s470
        %p472 = pneg %p265
        %p473 = pneg %p262
        %s474 = sand.u32 %s31, 1
        %s475 = scalar_lea.sflag [#allocation14], %s474
        %s476 = sand.u32 %s252, 1
        %s477 = smul.addr %s476, 128
        %s478 = scalar_lea.vmem [#allocation15], %s477
        %s479 = smul.u32 16, %s36
        %s480 = smul.u32 16, %s36
        %s481 = smul.u32 16, %s36
        %s482 = smul.u32 16, %s36
        %s483 = smul.u32 16, %s36
        %s484 = smul.u32 16, %s36
        %v485 = vld [vmem:[%s396] sm:$0xff]
        %v486 = vld [vmem:[%s396 + $0x8] sm:$0xff]
        %v487 = vld [vmem:[%s396 + $0x10] sm:$0xff]
        %v488 = vld [vmem:[%s396 + $0x18] sm:$0xff]
        %v489 = vld [vmem:[%s396 + $0x20] sm:$0xff]
        %v490 = vld [vmem:[%s396 + $0x28] sm:$0xff]
        %v491 = vld [vmem:[%s396 + $0x30] sm:$0xff]
        %v492 = vld [vmem:[%s396 + $0x38] sm:$0xff]
        %v493 = vld [vmem:[%s396 + $0x40] sm:$0xff]
        %v494 = vld [vmem:[%s396 + $0x48] sm:$0xff]
        %v495 = vld [vmem:[%s396 + $0x50] sm:$0xff]
        %v496 = vld [vmem:[%s396 + $0x58] sm:$0xff]
        %v497 = vld [vmem:[%s396 + $0x60] sm:$0xff]
        %v498 = vld [vmem:[%s396 + $0x68] sm:$0xff]
        %v499 = vld [vmem:[%s396 + $0x70] sm:$0xff]
        %v500 = vld [vmem:[%s396 + $0x78] sm:$0xff]
        %v501 = vld [vmem:[%s396 + $0x80] sm:$0xff]
        %v502 = vld [vmem:[%s396 + $0x88] sm:$0xff]
        %v503 = vld [vmem:[%s396 + $0x90] sm:$0xff]
        %v504 = vld [vmem:[%s396 + $0x98] sm:$0xff]
        %v505 = vld [vmem:[%s396 + $0xa0] sm:$0xff]
        %v506 = vld [vmem:[%s396 + $0xa8] sm:$0xff]
        %v507 = vld [vmem:[%s396 + $0xb0] sm:$0xff]
        %v508 = vld [vmem:[%s396 + $0xb8] sm:$0xff]
        %v509 = vld [vmem:[%s396 + $0xc0] sm:$0xff]
        %v510 = vld [vmem:[%s396 + $0xc8] sm:$0xff]
        %v511 = vld [vmem:[%s396 + $0xd0] sm:$0xff]
        %v512 = vld [vmem:[%s396 + $0xd8] sm:$0xff]
        %v513 = vld [vmem:[%s396 + $0xe0] sm:$0xff]
        %v514 = vld [vmem:[%s396 + $0xe8] sm:$0xff]
        %v515 = vld [vmem:[%s396 + $0xf0] sm:$0xff]
        %v516 = vld [vmem:[%s396 + $0xf8] sm:$0xff]
        %v517 = vadd.f32 %v485, %v486
        %518 = vadd.xlane.f32.xlu0 %v517
        %v519 = vpop.xlane.xlu0 %518
        %v520 = vadd.f32 %v487, %v488
        %521 = vadd.xlane.f32.xlu0 %v520
        %v522 = vpop.xlane.xlu0 %521
        %v523 = vadd.f32 %v489, %v490
        %524 = vadd.xlane.f32.xlu0 %v523
        %v525 = vpop.xlane.xlu0 %524
        %v526 = vadd.f32 %v491, %v492
        %527 = vadd.xlane.f32.xlu0 %v526
        %v528 = vpop.xlane.xlu0 %527
        %v529 = vadd.f32 %v493, %v494
        %530 = vadd.xlane.f32.xlu0 %v529
        %v531 = vpop.xlane.xlu0 %530
        %v532 = vadd.f32 %v495, %v496
        %533 = vadd.xlane.f32.xlu0 %v532
        %v534 = vpop.xlane.xlu0 %533
        %v535 = vadd.f32 %v497, %v498
        %536 = vadd.xlane.f32.xlu0 %v535
        %v537 = vpop.xlane.xlu0 %536
        %v538 = vadd.f32 %v499, %v500
        %539 = vadd.xlane.f32.xlu0 %v538
        %v540 = vpop.xlane.xlu0 %539
        %v541 = vadd.f32 %v501, %v502
        %542 = vadd.xlane.f32.xlu0 %v541
        %v543 = vpop.xlane.xlu0 %542
        %v544 = vadd.f32 %v503, %v504
        %545 = vadd.xlane.f32.xlu0 %v544
        %v546 = vpop.xlane.xlu0 %545
        %v547 = vadd.f32 %v505, %v506
        %548 = vadd.xlane.f32.xlu0 %v547
        %v549 = vpop.xlane.xlu0 %548
        %v550 = vadd.f32 %v507, %v508
        %551 = vadd.xlane.f32.xlu0 %v550
        %v552 = vpop.xlane.xlu0 %551
        %v553 = vadd.f32 %v509, %v510
        %554 = vadd.xlane.f32.xlu0 %v553
        %v555 = vpop.xlane.xlu0 %554
        %v556 = vadd.f32 %v511, %v512
        %557 = vadd.xlane.f32.xlu0 %v556
        %v558 = vpop.xlane.xlu0 %557
        %v559 = vadd.f32 %v513, %v514
        %560 = vadd.xlane.f32.xlu0 %v559
        %v561 = vpop.xlane.xlu0 %560
        %v562 = vadd.f32 %v515, %v516
        %563 = vadd.xlane.f32.xlu0 %v562
        %v564 = vpop.xlane.xlu0 %563
        %v565 = vrcp.pop 256.0
        %v566 = vmul.f32 %v519, %v565
        %v567 = vmul.f32 %v522, %v565
        %v568 = vmul.f32 %v525, %v565
        %v569 = vmul.f32 %v528, %v565
        %v570 = vmul.f32 %v531, %v565
        %v571 = vmul.f32 %v534, %v565
        %v572 = vmul.f32 %v537, %v565
        %v573 = vmul.f32 %v540, %v565
        %v574 = vmul.f32 %v543, %v565
        %v575 = vmul.f32 %v546, %v565
        %v576 = vmul.f32 %v549, %v565
        %v577 = vmul.f32 %v552, %v565
        %v578 = vmul.f32 %v555, %v565
        %v579 = vmul.f32 %v558, %v565
        %v580 = vmul.f32 %v561, %v565
        %v581 = vmul.f32 %v564, %v565
        %v582 = vsub.f32 %v485, %v566
        %v583 = vsub.f32 %v486, %v566
        %v584 = vsub.f32 %v487, %v567
        %v585 = vsub.f32 %v488, %v567
        %v586 = vsub.f32 %v489, %v568
        %v587 = vsub.f32 %v490, %v568
        %v588 = vsub.f32 %v491, %v569
        %v589 = vsub.f32 %v492, %v569
        %v590 = vsub.f32 %v493, %v570
        %v591 = vsub.f32 %v494, %v570
        %v592 = vsub.f32 %v495, %v571
        %v593 = vsub.f32 %v496, %v571
        %v594 = vsub.f32 %v497, %v572
        %v595 = vsub.f32 %v498, %v572
        %v596 = vsub.f32 %v499, %v573
        %v597 = vsub.f32 %v500, %v573
        %v598 = vsub.f32 %v501, %v574
        %v599 = vsub.f32 %v502, %v574
        %v600 = vsub.f32 %v503, %v575
        %v601 = vsub.f32 %v504, %v575
        %v602 = vsub.f32 %v505, %v576
        %v603 = vsub.f32 %v506, %v576
        %v604 = vsub.f32 %v507, %v577
        %v605 = vsub.f32 %v508, %v577
        %v606 = vsub.f32 %v509, %v578
        %v607 = vsub.f32 %v510, %v578
        %v608 = vsub.f32 %v511, %v579
        %v609 = vsub.f32 %v512, %v579
        %v610 = vsub.f32 %v513, %v580
        %v611 = vsub.f32 %v514, %v580
        %v612 = vsub.f32 %v515, %v581
        %v613 = vsub.f32 %v516, %v581
        %v614 = vmul.f32 %v582, %v582
        %v615 = vmul.f32 %v583, %v583
        %v616 = vmul.f32 %v584, %v584
        %v617 = vmul.f32 %v585, %v585
        %v618 = vmul.f32 %v586, %v586
        %v619 = vmul.f32 %v587, %v587
        %v620 = vmul.f32 %v588, %v588
        %v621 = vmul.f32 %v589, %v589
        %v622 = vmul.f32 %v590, %v590
        %v623 = vmul.f32 %v591, %v591
        %v624 = vmul.f32 %v592, %v592
        %v625 = vmul.f32 %v593, %v593
        %v626 = vmul.f32 %v594, %v594
        %v627 = vmul.f32 %v595, %v595
        %v628 = vmul.f32 %v596, %v596
        %v629 = vmul.f32 %v597, %v597
        %v630 = vmul.f32 %v598, %v598
        %v631 = vmul.f32 %v599, %v599
        %v632 = vmul.f32 %v600, %v600
        %v633 = vmul.f32 %v601, %v601
        %v634 = vmul.f32 %v602, %v602
        %v635 = vmul.f32 %v603, %v603
        %v636 = vmul.f32 %v604, %v604
        %v637 = vmul.f32 %v605, %v605
        %v638 = vmul.f32 %v606, %v606
        %v639 = vmul.f32 %v607, %v607
        %v640 = vmul.f32 %v608, %v608
        %v641 = vmul.f32 %v609, %v609
        %v642 = vmul.f32 %v610, %v610
        %v643 = vmul.f32 %v611, %v611
        %v644 = vmul.f32 %v612, %v612
        %v645 = vmul.f32 %v613, %v613
        %v646 = vadd.f32 %v614, %v615
        %647 = vadd.xlane.f32.xlu0 %v646
        %v648 = vpop.xlane.xlu0 %647
        %v649 = vadd.f32 %v616, %v617
        %650 = vadd.xlane.f32.xlu0 %v649
        %v651 = vpop.xlane.xlu0 %650
        %v652 = vadd.f32 %v618, %v619
        %653 = vadd.xlane.f32.xlu0 %v652
        %v654 = vpop.xlane.xlu0 %653
        %v655 = vadd.f32 %v620, %v621
        %656 = vadd.xlane.f32.xlu0 %v655
        %v657 = vpop.xlane.xlu0 %656
        %v658 = vadd.f32 %v622, %v623
        %659 = vadd.xlane.f32.xlu0 %v658
        %v660 = vpop.xlane.xlu0 %659
        %v661 = vadd.f32 %v624, %v625
        %662 = vadd.xlane.f32.xlu0 %v661
        %v663 = vpop.xlane.xlu0 %662
        %v664 = vadd.f32 %v626, %v627
        %665 = vadd.xlane.f32.xlu0 %v664
        %v666 = vpop.xlane.xlu0 %665
        %v667 = vadd.f32 %v628, %v629
        %668 = vadd.xlane.f32.xlu0 %v667
        %v669 = vpop.xlane.xlu0 %668
        %v670 = vadd.f32 %v630, %v631
        %671 = vadd.xlane.f32.xlu0 %v670
        %v672 = vpop.xlane.xlu0 %671
        %v673 = vadd.f32 %v632, %v633
        %674 = vadd.xlane.f32.xlu0 %v673
        %v675 = vpop.xlane.xlu0 %674
        %v676 = vadd.f32 %v634, %v635
        %677 = vadd.xlane.f32.xlu0 %v676
        %v678 = vpop.xlane.xlu0 %677
        %v679 = vadd.f32 %v636, %v637
        %680 = vadd.xlane.f32.xlu0 %v679
        %v681 = vpop.xlane.xlu0 %680
        %v682 = vadd.f32 %v638, %v639
        %683 = vadd.xlane.f32.xlu0 %v682
        %v684 = vpop.xlane.xlu0 %683
        %v685 = vadd.f32 %v640, %v641
        %686 = vadd.xlane.f32.xlu0 %v685
        %v687 = vpop.xlane.xlu0 %686
        %v688 = vadd.f32 %v642, %v643
        %689 = vadd.xlane.f32.xlu0 %v688
        %v690 = vpop.xlane.xlu0 %689
        %v691 = vadd.f32 %v644, %v645
        %692 = vadd.xlane.f32.xlu0 %v691
        %v693 = vpop.xlane.xlu0 %692
        %v694 = vmul.f32 %v648, %v565
        %v695 = vmul.f32 %v651, %v565
        %v696 = vmul.f32 %v654, %v565
        %v697 = vmul.f32 %v657, %v565
        %v698 = vmul.f32 %v660, %v565
        %v699 = vmul.f32 %v663, %v565
        %v700 = vmul.f32 %v666, %v565
        %v701 = vmul.f32 %v669, %v565
        %v702 = vmul.f32 %v672, %v565
        %v703 = vmul.f32 %v675, %v565
        %v704 = vmul.f32 %v678, %v565
        %v705 = vmul.f32 %v681, %v565
        %v706 = vmul.f32 %v684, %v565
        %v707 = vmul.f32 %v687, %v565
        %v708 = vmul.f32 %v690, %v565
        %v709 = vmul.f32 %v693, %v565
        %v710 = vadd.f32 %v694, 1e-05
        %v711 = vadd.f32 %v695, 1e-05
        %v712 = vadd.f32 %v696, 1e-05
        %v713 = vadd.f32 %v697, 1e-05
        %v714 = vadd.f32 %v698, 1e-05
        %v715 = vadd.f32 %v699, 1e-05
        %v716 = vadd.f32 %v700, 1e-05
        %v717 = vadd.f32 %v701, 1e-05
        %v718 = vadd.f32 %v702, 1e-05
        %v719 = vadd.f32 %v703, 1e-05
        %v720 = vadd.f32 %v704, 1e-05
        %v721 = vadd.f32 %v705, 1e-05
        %v722 = vadd.f32 %v706, 1e-05
        %v723 = vadd.f32 %v707, 1e-05
        %v724 = vadd.f32 %v708, 1e-05
        %v725 = vadd.f32 %v709, 1e-05
        %v726 = vrsqrt.pop %v710
        %v727 = vrsqrt.pop %v711
        %v728 = vrsqrt.pop %v712
        %v729 = vrsqrt.pop %v713
        %v730 = vrsqrt.pop %v714
        %v731 = vrsqrt.pop %v715
        %v732 = vrsqrt.pop %v716
        %v733 = vrsqrt.pop %v717
        %v734 = vrsqrt.pop %v718
        %v735 = vrsqrt.pop %v719
        %v736 = vrsqrt.pop %v720
        %v737 = vrsqrt.pop %v721
        %v738 = vrsqrt.pop %v722
        %v739 = vrsqrt.pop %v723
        %v740 = vrsqrt.pop %v724
        %v741 = vrsqrt.pop %v725
        %v742 = vmul.f32 %v582, %v726
        %v743 = vmul.f32 %v583, %v726
        %v744 = vmul.f32 %v584, %v727
        %v745 = vmul.f32 %v585, %v727
        %v746 = vmul.f32 %v586, %v728
        %v747 = vmul.f32 %v587, %v728
        %v748 = vmul.f32 %v588, %v729
        %v749 = vmul.f32 %v589, %v729
        %v750 = vmul.f32 %v590, %v730
        %v751 = vmul.f32 %v591, %v730
        %v752 = vmul.f32 %v592, %v731
        %v753 = vmul.f32 %v593, %v731
        %v754 = vmul.f32 %v594, %v732
        %v755 = vmul.f32 %v595, %v732
        %v756 = vmul.f32 %v596, %v733
        %v757 = vmul.f32 %v597, %v733
        %v758 = vmul.f32 %v598, %v734
        %v759 = vmul.f32 %v599, %v734
        %v760 = vmul.f32 %v600, %v735
        %v761 = vmul.f32 %v601, %v735
        %v762 = vmul.f32 %v602, %v736
        %v763 = vmul.f32 %v603, %v736
        %v764 = vmul.f32 %v604, %v737
        %v765 = vmul.f32 %v605, %v737
        %v766 = vmul.f32 %v606, %v738
        %v767 = vmul.f32 %v607, %v738
        %v768 = vmul.f32 %v608, %v739
        %v769 = vmul.f32 %v609, %v739
        %v770 = vmul.f32 %v610, %v740
        %v771 = vmul.f32 %v611, %v740
        %v772 = vmul.f32 %v612, %v741
        %v773 = vmul.f32 %v613, %v741
        %v774 = vld [vmem:[#allocation5] sm:$0x3]
        %v776 = vlaneseq
        %v777 = vshrl.u32 %v776, 7
        %v778 = vsub.s32 0, %v777
        %v779 = vrot.slane %v774, %v778
        %v780 = vlaneseq
        %v781 = vshrl.u32 %v780, 7
        %v782 = vsub.s32 1, %v781
        %v783 = vrot.slane %v774, %v782
        %v786 = vmul.f32 %v742, %v779
        %v787 = vmul.f32 %v743, %v783
        %v788 = vmul.f32 %v744, %v779
        %v789 = vmul.f32 %v745, %v783
        %v790 = vmul.f32 %v746, %v779
        %v791 = vmul.f32 %v747, %v783
        %v792 = vmul.f32 %v748, %v779
        %v793 = vmul.f32 %v749, %v783
        %v794 = vmul.f32 %v750, %v779
        %v795 = vmul.f32 %v751, %v783
        %v796 = vmul.f32 %v752, %v779
        %v797 = vmul.f32 %v753, %v783
        %v798 = vmul.f32 %v754, %v779
        %v799 = vmul.f32 %v755, %v783
        %v800 = vmul.f32 %v756, %v779
        %v801 = vmul.f32 %v757, %v783
        %v802 = vmul.f32 %v758, %v779
        %v803 = vmul.f32 %v759, %v783
        %v804 = vmul.f32 %v760, %v779
        %v805 = vmul.f32 %v761, %v783
        %v806 = vmul.f32 %v762, %v779
        %v807 = vmul.f32 %v763, %v783
        %v808 = vmul.f32 %v764, %v779
        %v809 = vmul.f32 %v765, %v783
        %v810 = vmul.f32 %v766, %v779
        %v811 = vmul.f32 %v767, %v783
        %v812 = vmul.f32 %v768, %v779
        %v813 = vmul.f32 %v769, %v783
        %v814 = vmul.f32 %v770, %v779
        %v815 = vmul.f32 %v771, %v783
        %v816 = vmul.f32 %v772, %v779
        %v817 = vmul.f32 %v773, %v783
        %v818 = vld [vmem:[#allocation7] sm:$0x3]
        %v820 = vlaneseq
        %v821 = vshrl.u32 %v820, 7
        %v822 = vsub.s32 0, %v821
        %v823 = vrot.slane %v818, %v822
        %v824 = vlaneseq
        %v825 = vshrl.u32 %v824, 7
        %v826 = vsub.s32 1, %v825
        %v827 = vrot.slane %v818, %v826
        %v830 = vadd.f32 %v786, %v823
        %v831 = vadd.f32 %v787, %v827
        %v832 = vadd.f32 %v788, %v823
        %v833 = vadd.f32 %v789, %v827
        %v834 = vadd.f32 %v790, %v823
        %v835 = vadd.f32 %v791, %v827
        %v836 = vadd.f32 %v792, %v823
        %v837 = vadd.f32 %v793, %v827
        %v838 = vadd.f32 %v794, %v823
        %v839 = vadd.f32 %v795, %v827
        %v840 = vadd.f32 %v796, %v823
        %v841 = vadd.f32 %v797, %v827
        %v842 = vadd.f32 %v798, %v823
        %v843 = vadd.f32 %v799, %v827
        %v844 = vadd.f32 %v800, %v823
        %v845 = vadd.f32 %v801, %v827
        %v846 = vadd.f32 %v802, %v823
        %v847 = vadd.f32 %v803, %v827
        %v848 = vadd.f32 %v804, %v823
        %v849 = vadd.f32 %v805, %v827
        %v850 = vadd.f32 %v806, %v823
        %v851 = vadd.f32 %v807, %v827
        %v852 = vadd.f32 %v808, %v823
        %v853 = vadd.f32 %v809, %v827
        %v854 = vadd.f32 %v810, %v823
        %v855 = vadd.f32 %v811, %v827
        %v856 = vadd.f32 %v812, %v823
        %v857 = vadd.f32 %v813, %v827
        %v858 = vadd.f32 %v814, %v823
        %v859 = vadd.f32 %v815, %v827
        %v860 = vadd.f32 %v816, %v823
        %v861 = vadd.f32 %v817, %v827
        %v862 = vpack.c.bf16 %v832, %v830
        %v863 = vpack.c.bf16 %v833, %v831
        %v864 = vpack.c.bf16 %v836, %v834
        %v865 = vpack.c.bf16 %v837, %v835
        %v866 = vpack.c.bf16 %v840, %v838
        %v867 = vpack.c.bf16 %v841, %v839
        %v868 = vpack.c.bf16 %v844, %v842
        %v869 = vpack.c.bf16 %v845, %v843
        %v870 = vpack.c.bf16 %v848, %v846
        %v871 = vpack.c.bf16 %v849, %v847
        %v872 = vpack.c.bf16 %v852, %v850
        %v873 = vpack.c.bf16 %v853, %v851
        %v874 = vpack.c.bf16 %v856, %v854
        %v875 = vpack.c.bf16 %v857, %v855
        %v876 = vpack.c.bf16 %v860, %v858
        %v877 = vpack.c.bf16 %v861, %v859
        %v878 = vld [vmem:[#allocation8] sm:$0xff]
        %v879 = vld [vmem:[#allocation8 + $0x8] sm:$0xff]
        %v880 = vld [vmem:[#allocation8 + $0x10] sm:$0xff]
        %v881 = vld [vmem:[#allocation8 + $0x18] sm:$0xff]
        %v882 = vld [vmem:[#allocation8 + $0x20] sm:$0xff]
        %v883 = vld [vmem:[#allocation8 + $0x28] sm:$0xff]
        %v884 = vld [vmem:[#allocation8 + $0x30] sm:$0xff]
        %v885 = vld [vmem:[#allocation8 + $0x38] sm:$0xff]
        %v886 = vld [vmem:[#allocation8 + $0x40] sm:$0xff]
        %v887 = vld [vmem:[#allocation8 + $0x48] sm:$0xff]
        %v888 = vld [vmem:[#allocation8 + $0x50] sm:$0xff]
        %v889 = vld [vmem:[#allocation8 + $0x58] sm:$0xff]
        %v890 = vld [vmem:[#allocation8 + $0x60] sm:$0xff]
        %v891 = vld [vmem:[#allocation8 + $0x68] sm:$0xff]
        %v892 = vld [vmem:[#allocation8 + $0x70] sm:$0xff]
        %v893 = vld [vmem:[#allocation8 + $0x78] sm:$0xff]
        %v894 = vld [vmem:[#allocation8 + $0x80] sm:$0xff]
        %v895 = vld [vmem:[#allocation8 + $0x88] sm:$0xff]
        %v896 = vld [vmem:[#allocation8 + $0x90] sm:$0xff]
        %v897 = vld [vmem:[#allocation8 + $0x98] sm:$0xff]
        %v898 = vld [vmem:[#allocation8 + $0xa0] sm:$0xff]
        %v899 = vld [vmem:[#allocation8 + $0xa8] sm:$0xff]
        %v900 = vld [vmem:[#allocation8 + $0xb0] sm:$0xff]
        %v901 = vld [vmem:[#allocation8 + $0xb8] sm:$0xff]
        %v902 = vld [vmem:[#allocation8 + $0xc0] sm:$0xff]
        %v903 = vld [vmem:[#allocation8 + $0xc8] sm:$0xff]
        %v904 = vld [vmem:[#allocation8 + $0xd0] sm:$0xff]
        %v905 = vld [vmem:[#allocation8 + $0xd8] sm:$0xff]
        %v906 = vld [vmem:[#allocation8 + $0xe0] sm:$0xff]
        %v907 = vld [vmem:[#allocation8 + $0xe8] sm:$0xff]
        %v908 = vld [vmem:[#allocation8 + $0xf0] sm:$0xff]
        %v909 = vld [vmem:[#allocation8 + $0xf8] sm:$0xff]
        %v910 = vld [vmem:[#allocation8 + $0x100] sm:$0xff]
        %v911 = vld [vmem:[#allocation8 + $0x108] sm:$0xff]
        %v912 = vld [vmem:[#allocation8 + $0x110] sm:$0xff]
        %v913 = vld [vmem:[#allocation8 + $0x118] sm:$0xff]
        %v914 = vld [vmem:[#allocation8 + $0x120] sm:$0xff]
        %v915 = vld [vmem:[#allocation8 + $0x128] sm:$0xff]
        %v916 = vld [vmem:[#allocation8 + $0x130] sm:$0xff]
        %v917 = vld [vmem:[#allocation8 + $0x138] sm:$0xff]
        %v918 = vld [vmem:[#allocation8 + $0x140] sm:$0xff]
        %v919 = vld [vmem:[#allocation8 + $0x148] sm:$0xff]
        %v920 = vld [vmem:[#allocation8 + $0x150] sm:$0xff]
        %v921 = vld [vmem:[#allocation8 + $0x158] sm:$0xff]
        %v922 = vld [vmem:[#allocation8 + $0x160] sm:$0xff]
        %v923 = vld [vmem:[#allocation8 + $0x168] sm:$0xff]
        %v924 = vld [vmem:[#allocation8 + $0x170] sm:$0xff]
        %v925 = vld [vmem:[#allocation8 + $0x178] sm:$0xff]
        %v926 = vld [vmem:[#allocation8 + $0x180] sm:$0xff]
        %v927 = vld [vmem:[#allocation8 + $0x188] sm:$0xff]
        %v928 = vld [vmem:[#allocation8 + $0x190] sm:$0xff]
        %v929 = vld [vmem:[#allocation8 + $0x198] sm:$0xff]
        %v930 = vld [vmem:[#allocation8 + $0x1a0] sm:$0xff]
        %v931 = vld [vmem:[#allocation8 + $0x1a8] sm:$0xff]
        %v932 = vld [vmem:[#allocation8 + $0x1b0] sm:$0xff]
        %v933 = vld [vmem:[#allocation8 + $0x1b8] sm:$0xff]
        %v934 = vld [vmem:[#allocation8 + $0x1c0] sm:$0xff]
        %v935 = vld [vmem:[#allocation8 + $0x1c8] sm:$0xff]
        %v936 = vld [vmem:[#allocation8 + $0x1d0] sm:$0xff]
        %v937 = vld [vmem:[#allocation8 + $0x1d8] sm:$0xff]
        %v938 = vld [vmem:[#allocation8 + $0x1e0] sm:$0xff]
        %v939 = vld [vmem:[#allocation8 + $0x1e8] sm:$0xff]
        %v940 = vld [vmem:[#allocation8 + $0x1f0] sm:$0xff]
        %v941 = vld [vmem:[#allocation8 + $0x1f8] sm:$0xff]
        %v942 = vld [vmem:[#allocation8 + $0x200] sm:$0xff]
        %v943 = vld [vmem:[#allocation8 + $0x208] sm:$0xff]
        %v944 = vld [vmem:[#allocation8 + $0x210] sm:$0xff]
        %v945 = vld [vmem:[#allocation8 + $0x218] sm:$0xff]
        %v946 = vld [vmem:[#allocation8 + $0x220] sm:$0xff]
        %v947 = vld [vmem:[#allocation8 + $0x228] sm:$0xff]
        %v948 = vld [vmem:[#allocation8 + $0x230] sm:$0xff]
        %v949 = vld [vmem:[#allocation8 + $0x238] sm:$0xff]
        %v950 = vld [vmem:[#allocation8 + $0x240] sm:$0xff]
        %v951 = vld [vmem:[#allocation8 + $0x248] sm:$0xff]
        %v952 = vld [vmem:[#allocation8 + $0x250] sm:$0xff]
        %v953 = vld [vmem:[#allocation8 + $0x258] sm:$0xff]
        %v954 = vld [vmem:[#allocation8 + $0x260] sm:$0xff]
        %v955 = vld [vmem:[#allocation8 + $0x268] sm:$0xff]
        %v956 = vld [vmem:[#allocation8 + $0x270] sm:$0xff]
        %v957 = vld [vmem:[#allocation8 + $0x278] sm:$0xff]
        %v958 = vld [vmem:[#allocation8 + $0x280] sm:$0xff]
        %v959 = vld [vmem:[#allocation8 + $0x288] sm:$0xff]
        %v960 = vld [vmem:[#allocation8 + $0x290] sm:$0xff]
        %v961 = vld [vmem:[#allocation8 + $0x298] sm:$0xff]
        %v962 = vld [vmem:[#allocation8 + $0x2a0] sm:$0xff]
        %v963 = vld [vmem:[#allocation8 + $0x2a8] sm:$0xff]
        %v964 = vld [vmem:[#allocation8 + $0x2b0] sm:$0xff]
        %v965 = vld [vmem:[#allocation8 + $0x2b8] sm:$0xff]
        %v966 = vld [vmem:[#allocation8 + $0x2c0] sm:$0xff]
        %v967 = vld [vmem:[#allocation8 + $0x2c8] sm:$0xff]
        %v968 = vld [vmem:[#allocation8 + $0x2d0] sm:$0xff]
        %v969 = vld [vmem:[#allocation8 + $0x2d8] sm:$0xff]
        %v970 = vld [vmem:[#allocation8 + $0x2e0] sm:$0xff]
        %v971 = vld [vmem:[#allocation8 + $0x2e8] sm:$0xff]
        %v972 = vld [vmem:[#allocation8 + $0x2f0] sm:$0xff]
        %v973 = vld [vmem:[#allocation8 + $0x2f8] sm:$0xff]
        %v1070 = vunpack.c.l.b16 %v878
        %v1071 = vunpack.c.h.b16 %v878
        %v1072 = vunpack.c.l.b16 %v879
        %v1073 = vunpack.c.h.b16 %v879
        %v1074 = vunpack.c.l.b16 %v880
        %v1075 = vunpack.c.h.b16 %v880
        %v1076 = vunpack.c.l.b16 %v881
        %v1077 = vunpack.c.h.b16 %v881
        %v1078 = vunpack.c.l.b16 %v882
        %v1079 = vunpack.c.h.b16 %v882
        %v1080 = vunpack.c.l.b16 %v883
        %v1081 = vunpack.c.h.b16 %v883
        %v1082 = vunpack.c.l.b16 %v884
        %v1083 = vunpack.c.h.b16 %v884
        %v1084 = vunpack.c.l.b16 %v885
        %v1085 = vunpack.c.h.b16 %v885
        %v1086 = vunpack.c.l.b16 %v886
        %v1087 = vunpack.c.h.b16 %v886
        %v1088 = vunpack.c.l.b16 %v887
        %v1089 = vunpack.c.h.b16 %v887
        %v1090 = vunpack.c.l.b16 %v888
        %v1091 = vunpack.c.h.b16 %v888
        %v1092 = vunpack.c.l.b16 %v889
        %v1093 = vunpack.c.h.b16 %v889
        %v1094 = vunpack.c.l.b16 %v890
        %v1095 = vunpack.c.h.b16 %v890
        %v1096 = vunpack.c.l.b16 %v891
        %v1097 = vunpack.c.h.b16 %v891
        %v1098 = vunpack.c.l.b16 %v892
        %v1099 = vunpack.c.h.b16 %v892
        %v1100 = vunpack.c.l.b16 %v893
        %v1101 = vunpack.c.h.b16 %v893
        %v1102 = vunpack.c.l.b16 %v894
        %v1103 = vunpack.c.h.b16 %v894
        %v1104 = vunpack.c.l.b16 %v895
        %v1105 = vunpack.c.h.b16 %v895
        %v1106 = vunpack.c.l.b16 %v896
        %v1107 = vunpack.c.h.b16 %v896
        %v1108 = vunpack.c.l.b16 %v897
        %v1109 = vunpack.c.h.b16 %v897
        %v1110 = vunpack.c.l.b16 %v898
        %v1111 = vunpack.c.h.b16 %v898
        %v1112 = vunpack.c.l.b16 %v899
        %v1113 = vunpack.c.h.b16 %v899
        %v1114 = vunpack.c.l.b16 %v900
        %v1115 = vunpack.c.h.b16 %v900
        %v1116 = vunpack.c.l.b16 %v901
        %v1117 = vunpack.c.h.b16 %v901
        %v1118 = vunpack.c.l.b16 %v902
        %v1119 = vunpack.c.h.b16 %v902
        %v1120 = vunpack.c.l.b16 %v903
        %v1121 = vunpack.c.h.b16 %v903
        %v1122 = vunpack.c.l.b16 %v904
        %v1123 = vunpack.c.h.b16 %v904
        %v1124 = vunpack.c.l.b16 %v905
        %v1125 = vunpack.c.h.b16 %v905
        %v1126 = vunpack.c.l.b16 %v906
        %v1127 = vunpack.c.h.b16 %v906
        %v1128 = vunpack.c.l.b16 %v907
        %v1129 = vunpack.c.h.b16 %v907
        %v1130 = vunpack.c.l.b16 %v908
        %v1131 = vunpack.c.h.b16 %v908
        %v1132 = vunpack.c.l.b16 %v909
        %v1133 = vunpack.c.h.b16 %v909
        %v1134 = vunpack.c.l.b16 %v910
        %v1135 = vunpack.c.h.b16 %v910
        %v1136 = vunpack.c.l.b16 %v911
        %v1137 = vunpack.c.h.b16 %v911
        %v1138 = vunpack.c.l.b16 %v912
        %v1139 = vunpack.c.h.b16 %v912
        %v1140 = vunpack.c.l.b16 %v913
        %v1141 = vunpack.c.h.b16 %v913
        %v1142 = vunpack.c.l.b16 %v914
        %v1143 = vunpack.c.h.b16 %v914
        %v1144 = vunpack.c.l.b16 %v915
        %v1145 = vunpack.c.h.b16 %v915
        %v1146 = vunpack.c.l.b16 %v916
        %v1147 = vunpack.c.h.b16 %v916
        %v1148 = vunpack.c.l.b16 %v917
        %v1149 = vunpack.c.h.b16 %v917
        %v1150 = vunpack.c.l.b16 %v918
        %v1151 = vunpack.c.h.b16 %v918
        %v1152 = vunpack.c.l.b16 %v919
        %v1153 = vunpack.c.h.b16 %v919
        %v1154 = vunpack.c.l.b16 %v920
        %v1155 = vunpack.c.h.b16 %v920
        %v1156 = vunpack.c.l.b16 %v921
        %v1157 = vunpack.c.h.b16 %v921
        %v1158 = vunpack.c.l.b16 %v922
        %v1159 = vunpack.c.h.b16 %v922
        %v1160 = vunpack.c.l.b16 %v923
        %v1161 = vunpack.c.h.b16 %v923
        %v1162 = vunpack.c.l.b16 %v924
        %v1163 = vunpack.c.h.b16 %v924
        %v1164 = vunpack.c.l.b16 %v925
        %v1165 = vunpack.c.h.b16 %v925
        %v1166 = vunpack.c.l.b16 %v926
        %v1167 = vunpack.c.h.b16 %v926
        %v1168 = vunpack.c.l.b16 %v927
        %v1169 = vunpack.c.h.b16 %v927
        %v1170 = vunpack.c.l.b16 %v928
        %v1171 = vunpack.c.h.b16 %v928
        %v1172 = vunpack.c.l.b16 %v929
        %v1173 = vunpack.c.h.b16 %v929
        %v1174 = vunpack.c.l.b16 %v930
        %v1175 = vunpack.c.h.b16 %v930
        %v1176 = vunpack.c.l.b16 %v931
        %v1177 = vunpack.c.h.b16 %v931
        %v1178 = vunpack.c.l.b16 %v932
        %v1179 = vunpack.c.h.b16 %v932
        %v1180 = vunpack.c.l.b16 %v933
        %v1181 = vunpack.c.h.b16 %v933
        %v1182 = vunpack.c.l.b16 %v934
        %v1183 = vunpack.c.h.b16 %v934
        %v1184 = vunpack.c.l.b16 %v935
        %v1185 = vunpack.c.h.b16 %v935
        %v1186 = vunpack.c.l.b16 %v936
        %v1187 = vunpack.c.h.b16 %v936
        %v1188 = vunpack.c.l.b16 %v937
        %v1189 = vunpack.c.h.b16 %v937
        %v1190 = vunpack.c.l.b16 %v938
        %v1191 = vunpack.c.h.b16 %v938
        %v1192 = vunpack.c.l.b16 %v939
        %v1193 = vunpack.c.h.b16 %v939
        %v1194 = vunpack.c.l.b16 %v940
        %v1195 = vunpack.c.h.b16 %v940
        %v1196 = vunpack.c.l.b16 %v941
        %v1197 = vunpack.c.h.b16 %v941
        %v1198 = vunpack.c.l.b16 %v942
        %v1199 = vunpack.c.h.b16 %v942
        %v1200 = vunpack.c.l.b16 %v943
        %v1201 = vunpack.c.h.b16 %v943
        %v1202 = vunpack.c.l.b16 %v944
        %v1203 = vunpack.c.h.b16 %v944
        %v1204 = vunpack.c.l.b16 %v945
        %v1205 = vunpack.c.h.b16 %v945
        %v1206 = vunpack.c.l.b16 %v946
        %v1207 = vunpack.c.h.b16 %v946
        %v1208 = vunpack.c.l.b16 %v947
        %v1209 = vunpack.c.h.b16 %v947
        %v1210 = vunpack.c.l.b16 %v948
        %v1211 = vunpack.c.h.b16 %v948
        %v1212 = vunpack.c.l.b16 %v949
        %v1213 = vunpack.c.h.b16 %v949
        %v1214 = vunpack.c.l.b16 %v950
        %v1215 = vunpack.c.h.b16 %v950
        %v1216 = vunpack.c.l.b16 %v951
        %v1217 = vunpack.c.h.b16 %v951
        %v1218 = vunpack.c.l.b16 %v952
        %v1219 = vunpack.c.h.b16 %v952
        %v1220 = vunpack.c.l.b16 %v953
        %v1221 = vunpack.c.h.b16 %v953
        %v1222 = vunpack.c.l.b16 %v954
        %v1223 = vunpack.c.h.b16 %v954
        %v1224 = vunpack.c.l.b16 %v955
        %v1225 = vunpack.c.h.b16 %v955
        %v1226 = vunpack.c.l.b16 %v956
        %v1227 = vunpack.c.h.b16 %v956
        %v1228 = vunpack.c.l.b16 %v957
        %v1229 = vunpack.c.h.b16 %v957
        %v1230 = vunpack.c.l.b16 %v958
        %v1231 = vunpack.c.h.b16 %v958
        %v1232 = vunpack.c.l.b16 %v959
        %v1233 = vunpack.c.h.b16 %v959
        %v1234 = vunpack.c.l.b16 %v960
        %v1235 = vunpack.c.h.b16 %v960
        %v1236 = vunpack.c.l.b16 %v961
        %v1237 = vunpack.c.h.b16 %v961
        %v1238 = vunpack.c.l.b16 %v962
        %v1239 = vunpack.c.h.b16 %v962
        %v1240 = vunpack.c.l.b16 %v963
        %v1241 = vunpack.c.h.b16 %v963
        %v1242 = vunpack.c.l.b16 %v964
        %v1243 = vunpack.c.h.b16 %v964
        %v1244 = vunpack.c.l.b16 %v965
        %v1245 = vunpack.c.h.b16 %v965
        %v1246 = vunpack.c.l.b16 %v966
        %v1247 = vunpack.c.h.b16 %v966
        %v1248 = vunpack.c.l.b16 %v967
        %v1249 = vunpack.c.h.b16 %v967
        %v1250 = vunpack.c.l.b16 %v968
        %v1251 = vunpack.c.h.b16 %v968
        %v1252 = vunpack.c.l.b16 %v969
        %v1253 = vunpack.c.h.b16 %v969
        %v1254 = vunpack.c.l.b16 %v970
        %v1255 = vunpack.c.h.b16 %v970
        %v1256 = vunpack.c.l.b16 %v971
        %v1257 = vunpack.c.h.b16 %v971
        %v1258 = vunpack.c.l.b16 %v972
        %v1259 = vunpack.c.h.b16 %v972
        %v1260 = vunpack.c.l.b16 %v973
        %v1261 = vunpack.c.h.b16 %v973
        %v1262 = vpack.c.b16 %v1076, %v1070
        %v1263 = vpack.c.b16 %v1077, %v1071
        %v1264 = vpack.c.b16 %v1078, %v1072
        %v1265 = vpack.c.b16 %v1079, %v1073
        %v1266 = vpack.c.b16 %v1080, %v1074
        %v1267 = vpack.c.b16 %v1081, %v1075
        %v1268 = vpack.c.b16 %v1088, %v1082
        %v1269 = vpack.c.b16 %v1089, %v1083
        %v1270 = vpack.c.b16 %v1090, %v1084
        %v1271 = vpack.c.b16 %v1091, %v1085
        %v1272 = vpack.c.b16 %v1092, %v1086
        %v1273 = vpack.c.b16 %v1093, %v1087
        %v1274 = vpack.c.b16 %v1100, %v1094
        %v1275 = vpack.c.b16 %v1101, %v1095
        %v1276 = vpack.c.b16 %v1102, %v1096
        %v1277 = vpack.c.b16 %v1103, %v1097
        %v1278 = vpack.c.b16 %v1104, %v1098
        %v1279 = vpack.c.b16 %v1105, %v1099
        %v1280 = vpack.c.b16 %v1112, %v1106
        %v1281 = vpack.c.b16 %v1113, %v1107
        %v1282 = vpack.c.b16 %v1114, %v1108
        %v1283 = vpack.c.b16 %v1115, %v1109
        %v1284 = vpack.c.b16 %v1116, %v1110
        %v1285 = vpack.c.b16 %v1117, %v1111
        %v1286 = vpack.c.b16 %v1124, %v1118
        %v1287 = vpack.c.b16 %v1125, %v1119
        %v1288 = vpack.c.b16 %v1126, %v1120
        %v1289 = vpack.c.b16 %v1127, %v1121
        %v1290 = vpack.c.b16 %v1128, %v1122
        %v1291 = vpack.c.b16 %v1129, %v1123
        %v1292 = vpack.c.b16 %v1136, %v1130
        %v1293 = vpack.c.b16 %v1137, %v1131
        %v1294 = vpack.c.b16 %v1138, %v1132
        %v1295 = vpack.c.b16 %v1139, %v1133
        %v1296 = vpack.c.b16 %v1140, %v1134
        %v1297 = vpack.c.b16 %v1141, %v1135
        %v1298 = vpack.c.b16 %v1148, %v1142
        %v1299 = vpack.c.b16 %v1149, %v1143
        %v1300 = vpack.c.b16 %v1150, %v1144
        %v1301 = vpack.c.b16 %v1151, %v1145
        %v1302 = vpack.c.b16 %v1152, %v1146
        %v1303 = vpack.c.b16 %v1153, %v1147
        %v1304 = vpack.c.b16 %v1160, %v1154
        %v1305 = vpack.c.b16 %v1161, %v1155
        %v1306 = vpack.c.b16 %v1162, %v1156
        %v1307 = vpack.c.b16 %v1163, %v1157
        %v1308 = vpack.c.b16 %v1164, %v1158
        %v1309 = vpack.c.b16 %v1165, %v1159
        %v1310 = vpack.c.b16 %v1172, %v1166
        %v1311 = vpack.c.b16 %v1173, %v1167
        %v1312 = vpack.c.b16 %v1174, %v1168
        %v1313 = vpack.c.b16 %v1175, %v1169
        %v1314 = vpack.c.b16 %v1176, %v1170
        %v1315 = vpack.c.b16 %v1177, %v1171
        %v1316 = vpack.c.b16 %v1184, %v1178
        %v1317 = vpack.c.b16 %v1185, %v1179
        %v1318 = vpack.c.b16 %v1186, %v1180
        %v1319 = vpack.c.b16 %v1187, %v1181
        %v1320 = vpack.c.b16 %v1188, %v1182
        %v1321 = vpack.c.b16 %v1189, %v1183
        %v1322 = vpack.c.b16 %v1196, %v1190
        %v1323 = vpack.c.b16 %v1197, %v1191
        %v1324 = vpack.c.b16 %v1198, %v1192
        %v1325 = vpack.c.b16 %v1199, %v1193
        %v1326 = vpack.c.b16 %v1200, %v1194
        %v1327 = vpack.c.b16 %v1201, %v1195
        %v1328 = vpack.c.b16 %v1208, %v1202
        %v1329 = vpack.c.b16 %v1209, %v1203
        %v1330 = vpack.c.b16 %v1210, %v1204
        %v1331 = vpack.c.b16 %v1211, %v1205
        %v1332 = vpack.c.b16 %v1212, %v1206
        %v1333 = vpack.c.b16 %v1213, %v1207
        %v1334 = vpack.c.b16 %v1220, %v1214
        %v1335 = vpack.c.b16 %v1221, %v1215
        %v1336 = vpack.c.b16 %v1222, %v1216
        %v1337 = vpack.c.b16 %v1223, %v1217
        %v1338 = vpack.c.b16 %v1224, %v1218
        %v1339 = vpack.c.b16 %v1225, %v1219
        %v1340 = vpack.c.b16 %v1232, %v1226
        %v1341 = vpack.c.b16 %v1233, %v1227
        %v1342 = vpack.c.b16 %v1234, %v1228
        %v1343 = vpack.c.b16 %v1235, %v1229
        %v1344 = vpack.c.b16 %v1236, %v1230
        %v1345 = vpack.c.b16 %v1237, %v1231
        %v1346 = vpack.c.b16 %v1244, %v1238
        %v1347 = vpack.c.b16 %v1245, %v1239
        %v1348 = vpack.c.b16 %v1246, %v1240
        %v1349 = vpack.c.b16 %v1247, %v1241
        %v1350 = vpack.c.b16 %v1248, %v1242
        %v1351 = vpack.c.b16 %v1249, %v1243
        %v1352 = vpack.c.b16 %v1256, %v1250
        %v1353 = vpack.c.b16 %v1257, %v1251
        %v1354 = vpack.c.b16 %v1258, %v1252
        %v1355 = vpack.c.b16 %v1259, %v1253
        %v1356 = vpack.c.b16 %v1260, %v1254
        %v1357 = vpack.c.b16 %v1261, %v1255
        %1454 = vmatprep.subr.bf16.mxu0 %v1263
        %1455 = vmatpush1.bf16.msra.mxu0 %v1262
        %1456 = vmatprep.subr.bf16.mxu0 %v1269
        %1457 = vmatpush1.bf16.msra.mxu0 %v1268
        %1458 = vmatprep.subr.bf16.mxu0 %v1275
        %1459 = vmatpush1.bf16.msra.mxu0 %v1274
        %1460 = vmatprep.subr.bf16.mxu0 %v1281
        %1461 = vmatpush1.bf16.msra.mxu0 %v1280
        %1462 = vmatprep.subr.bf16.mxu0 %v1287
        %1463 = vmatpush1.bf16.msra.mxu0 %v1286
        %1464 = vmatprep.subr.bf16.mxu0 %v1293
        %1465 = vmatpush1.bf16.msra.mxu0 %v1292
        %1466 = vmatprep.subr.bf16.mxu0 %v1299
        %1467 = vmatpush1.bf16.msra.mxu0 %v1298
        %1468 = vmatprep.subr.bf16.mxu0 %v1305
        %1469 = vmatpush1.bf16.msra.mxu0 %v1304
        %1470 = vmatprep.subr.bf16.mxu0 %v1311
        %1471 = vmatpush1.bf16.msra.mxu0 %v1310
        %1472 = vmatprep.subr.bf16.mxu0 %v1317
        %1473 = vmatpush1.bf16.msra.mxu0 %v1316
        %1474 = vmatprep.subr.bf16.mxu0 %v1323
        %1475 = vmatpush1.bf16.msra.mxu0 %v1322
        %1476 = vmatprep.subr.bf16.mxu0 %v1329
        %1477 = vmatpush1.bf16.msra.mxu0 %v1328
        %1478 = vmatprep.subr.bf16.mxu0 %v1335
        %1479 = vmatpush1.bf16.msra.mxu0 %v1334
        %1480 = vmatprep.subr.bf16.mxu0 %v1341
        %1481 = vmatpush1.bf16.msra.mxu0 %v1340
        %1482 = vmatprep.subr.bf16.mxu0 %v1347
        %1483 = vmatpush1.bf16.msra.mxu0 %v1346
        %1484 = vmatprep.subr.bf16.mxu0 %v1353
        %1485 = vmatpush1.bf16.msra.mxu0 %v1352
        %1486 = vmatprep.mubr.bf16.mxu0 %v863
        %1487 = vmatmul.mubr.bf16.gmra.mrb[0].mxu0 %v862
        %v1488 = vpop.f32.mrb[0].mxu0
        %v1489 = vadd.f32 0.0, %v1488
        %v1490 = vpop.f32.mrb[0].mxu0
        %v1491 = vadd.f32 0.0, %v1490
        %v1492 = vpop.f32.mrb[0].mxu0
        %v1493 = vadd.f32 0.0, %v1492
        %v1494 = vpop.f32.mrb[0].mxu0
        %v1495 = vadd.f32 0.0, %v1494
        %1496 = vmatprep.mubr.bf16.mxu0 %v865
        %1497 = vmatmul.mubr.bf16.gmra.mrb[0].mxu0 %v864
        %v1498 = vpop.f32.mrb[0].mxu0
        %v1499 = vadd.f32 0.0, %v1498
        %v1500 = vpop.f32.mrb[0].mxu0
        %v1501 = vadd.f32 0.0, %v1500
        %v1502 = vpop.f32.mrb[0].mxu0
        %v1503 = vadd.f32 0.0, %v1502
        %v1504 = vpop.f32.mrb[0].mxu0
        %v1505 = vadd.f32 0.0, %v1504
        %1506 = vmatprep.mubr.bf16.mxu0 %v867
        %1507 = vmatmul.mubr.bf16.gmra.mrb[0].mxu0 %v866
        %v1508 = vpop.f32.mrb[0].mxu0
        %v1509 = vadd.f32 0.0, %v1508
        %v1510 = vpop.f32.mrb[0].mxu0
        %v1511 = vadd.f32 0.0, %v1510
        %v1512 = vpop.f32.mrb[0].mxu0
        %v1513 = vadd.f32 0.0, %v1512
        %v1514 = vpop.f32.mrb[0].mxu0
        %v1515 = vadd.f32 0.0, %v1514
        %1516 = vmatprep.mubr.bf16.mxu0 %v869
        %1517 = vmatmul.mubr.bf16.gmra.mrb[0].mxu0 %v868
        %v1518 = vpop.f32.mrb[0].mxu0
        %v1519 = vadd.f32 0.0, %v1518
        %v1520 = vpop.f32.mrb[0].mxu0
        %v1521 = vadd.f32 0.0, %v1520
        %v1522 = vpop.f32.mrb[0].mxu0
        %v1523 = vadd.f32 0.0, %v1522
        %v1524 = vpop.f32.mrb[0].mxu0
        %v1525 = vadd.f32 0.0, %v1524
        %1526 = vmatprep.mubr.bf16.mxu0 %v871
        %1527 = vmatmul.mubr.bf16.gmra.mrb[0].mxu0 %v870
        %v1528 = vpop.f32.mrb[0].mxu0
        %v1529 = vadd.f32 0.0, %v1528
        %v1530 = vpop.f32.mrb[0].mxu0
        %v1531 = vadd.f32 0.0, %v1530
        %v1532 = vpop.f32.mrb[0].mxu0
        %v1533 = vadd.f32 0.0, %v1532
        %v1534 = vpop.f32.mrb[0].mxu0
        %v1535 = vadd.f32 0.0, %v1534
        %1536 = vmatprep.mubr.bf16.mxu0 %v873
        %1537 = vmatmul.mubr.bf16.gmra.mrb[0].mxu0 %v872
        %v1538 = vpop.f32.mrb[0].mxu0
        %v1539 = vadd.f32 0.0, %v1538
        %v1540 = vpop.f32.mrb[0].mxu0
        %v1541 = vadd.f32 0.0, %v1540
        %v1542 = vpop.f32.mrb[0].mxu0
        %v1543 = vadd.f32 0.0, %v1542
        %v1544 = vpop.f32.mrb[0].mxu0
        %v1545 = vadd.f32 0.0, %v1544
        %1546 = vmatprep.mubr.bf16.mxu0 %v875
        %1547 = vmatmul.mubr.bf16.gmra.mrb[0].mxu0 %v874
        %v1548 = vpop.f32.mrb[0].mxu0
        %v1549 = vadd.f32 0.0, %v1548
        %v1550 = vpop.f32.mrb[0].mxu0
        %v1551 = vadd.f32 0.0, %v1550
        %v1552 = vpop.f32.mrb[0].mxu0
        %v1553 = vadd.f32 0.0, %v1552
        %v1554 = vpop.f32.mrb[0].mxu0
        %v1555 = vadd.f32 0.0, %v1554
        %1556 = vmatprep.mubr.bf16.mxu0 %v877
        %1557 = vmatmul.mubr.bf16.gmra.mrb[0].mxu0 %v876
        %v1558 = vpop.f32.mrb[0].mxu0
        %v1559 = vadd.f32 0.0, %v1558
        %v1560 = vpop.f32.mrb[0].mxu0
        %v1561 = vadd.f32 0.0, %v1560
        %v1562 = vpop.f32.mrb[0].mxu0
        %v1563 = vadd.f32 0.0, %v1562
        %v1564 = vpop.f32.mrb[0].mxu0
        %v1565 = vadd.f32 0.0, %v1564
        %1566 = vdwg.mxu0
        %1567 = vmatprep.subr.bf16.mxu0 %v1265
        %1568 = vmatpush1.bf16.msra.mxu0 %v1264
        %1569 = vmatprep.subr.bf16.mxu0 %v1271
        %1570 = vmatpush1.bf16.msra.mxu0 %v1270
        %1571 = vmatprep.subr.bf16.mxu0 %v1277
        %1572 = vmatpush1.bf16.msra.mxu0 %v1276
        %1573 = vmatprep.subr.bf16.mxu0 %v1283
        %1574 = vmatpush1.bf16.msra.mxu0 %v1282
        %1575 = vmatprep.subr.bf16.mxu0 %v1289
        %1576 = vmatpush1.bf16.msra.mxu0 %v1288
        %1577 = vmatprep.subr.bf16.mxu0 %v1295
        %1578 = vmatpush1.bf16.msra.mxu0 %v1294
        %1579 = vmatprep.subr.bf16.mxu0 %v1301
        %1580 = vmatpush1.bf16.msra.mxu0 %v1300
        %1581 = vmatprep.subr.bf16.mxu0 %v1307
        %1582 = vmatpush1.bf16.msra.mxu0 %v1306
        %1583 = vmatprep.subr.bf16.mxu0 %v1313
        %1584 = vmatpush1.bf16.msra.mxu0 %v1312
        %1585 = vmatprep.subr.bf16.mxu0 %v1319
        %1586 = vmatpush1.bf16.msra.mxu0 %v1318
        %1587 = vmatprep.subr.bf16.mxu0 %v1325
        %1588 = vmatpush1.bf16.msra.mxu0 %v1324
        %1589 = vmatprep.subr.bf16.mxu0 %v1331
        %1590 = vmatpush1.bf16.msra.mxu0 %v1330
        %1591 = vmatprep.subr.bf16.mxu0 %v1337
        %1592 = vmatpush1.bf16.msra.mxu0 %v1336
        %1593 = vmatprep.subr.bf16.mxu0 %v1343
        %1594 = vmatpush1.bf16.msra.mxu0 %v1342
        %1595 = vmatprep.subr.bf16.mxu0 %v1349
        %1596 = vmatpush1.bf16.msra.mxu0 %v1348
        %1597 = vmatprep.subr.bf16.mxu0 %v1355
        %1598 = vmatpush1.bf16.msra.mxu0 %v1354
        %1599 = vmatprep.mubr.bf16.mxu0 %v863
        %1600 = vmatmul.mubr.bf16.gmra.mrb[0].mxu0 %v862
        %v1601 = vpop.f32.mrb[0].mxu0
        %v1602 = vadd.f32 0.0, %v1601
        %v1603 = vpop.f32.mrb[0].mxu0
        %v1604 = vadd.f32 0.0, %v1603
        %v1605 = vpop.f32.mrb[0].mxu0
        %v1606 = vadd.f32 0.0, %v1605
        %v1607 = vpop.f32.mrb[0].mxu0
        %v1608 = vadd.f32 0.0, %v1607
        %1609 = vmatprep.mubr.bf16.mxu0 %v865
        %1610 = vmatmul.mubr.bf16.gmra.mrb[0].mxu0 %v864
        %v1611 = vpop.f32.mrb[0].mxu0
        %v1612 = vadd.f32 0.0, %v1611
        %v1613 = vpop.f32.mrb[0].mxu0
        %v1614 = vadd.f32 0.0, %v1613
        %v1615 = vpop.f32.mrb[0].mxu0
        %v1616 = vadd.f32 0.0, %v1615
        %v1617 = vpop.f32.mrb[0].mxu0
        %v1618 = vadd.f32 0.0, %v1617
        %1619 = vmatprep.mubr.bf16.mxu0 %v867
        %1620 = vmatmul.mubr.bf16.gmra.mrb[0].mxu0 %v866
        %v1621 = vpop.f32.mrb[0].mxu0
        %v1622 = vadd.f32 0.0, %v1621
        %v1623 = vpop.f32.mrb[0].mxu0
        %v1624 = vadd.f32 0.0, %v1623
        %v1625 = vpop.f32.mrb[0].mxu0
        %v1626 = vadd.f32 0.0, %v1625
        %v1627 = vpop.f32.mrb[0].mxu0
        %v1628 = vadd.f32 0.0, %v1627
        %1629 = vmatprep.mubr.bf16.mxu0 %v869
        %1630 = vmatmul.mubr.bf16.gmra.mrb[0].mxu0 %v868
        %v1631 = vpop.f32.mrb[0].mxu0
        %v1632 = vadd.f32 0.0, %v1631
        %v1633 = vpop.f32.mrb[0].mxu0
        %v1634 = vadd.f32 0.0, %v1633
        %v1635 = vpop.f32.mrb[0].mxu0
        %v1636 = vadd.f32 0.0, %v1635
        %v1637 = vpop.f32.mrb[0].mxu0
        %v1638 = vadd.f32 0.0, %v1637
        %1639 = vmatprep.mubr.bf16.mxu0 %v871
        %1640 = vmatmul.mubr.bf16.gmra.mrb[0].mxu0 %v870
        %v1641 = vpop.f32.mrb[0].mxu0
        %v1642 = vadd.f32 0.0, %v1641
        %v1643 = vpop.f32.mrb[0].mxu0
        %v1644 = vadd.f32 0.0, %v1643
        %v1645 = vpop.f32.mrb[0].mxu0
        %v1646 = vadd.f32 0.0, %v1645
        %v1647 = vpop.f32.mrb[0].mxu0
        %v1648 = vadd.f32 0.0, %v1647
        %1649 = vmatprep.mubr.bf16.mxu0 %v873
        %1650 = vmatmul.mubr.bf16.gmra.mrb[0].mxu0 %v872
        %v1651 = vpop.f32.mrb[0].mxu0
        %v1652 = vadd.f32 0.0, %v1651
        %v1653 = vpop.f32.mrb[0].mxu0
        %v1654 = vadd.f32 0.0, %v1653
        %v1655 = vpop.f32.mrb[0].mxu0
        %v1656 = vadd.f32 0.0, %v1655
        %v1657 = vpop.f32.mrb[0].mxu0
        %v1658 = vadd.f32 0.0, %v1657
        %1659 = vmatprep.mubr.bf16.mxu0 %v875
        %1660 = vmatmul.mubr.bf16.gmra.mrb[0].mxu0 %v874
        %v1661 = vpop.f32.mrb[0].mxu0
        %v1662 = vadd.f32 0.0, %v1661
        %v1663 = vpop.f32.mrb[0].mxu0
        %v1664 = vadd.f32 0.0, %v1663
        %v1665 = vpop.f32.mrb[0].mxu0
        %v1666 = vadd.f32 0.0, %v1665
        %v1667 = vpop.f32.mrb[0].mxu0
        %v1668 = vadd.f32 0.0, %v1667
        %1669 = vmatprep.mubr.bf16.mxu0 %v877
        %1670 = vmatmul.mubr.bf16.gmra.mrb[0].mxu0 %v876
        %v1671 = vpop.f32.mrb[0].mxu0
        %v1672 = vadd.f32 0.0, %v1671
        %v1673 = vpop.f32.mrb[0].mxu0
        %v1674 = vadd.f32 0.0, %v1673
        %v1675 = vpop.f32.mrb[0].mxu0
        %v1676 = vadd.f32 0.0, %v1675
        %v1677 = vpop.f32.mrb[0].mxu0
        %v1678 = vadd.f32 0.0, %v1677
        %1679 = vdwg.mxu0
        %1680 = vmatprep.subr.bf16.mxu0 %v1267
        %1681 = vmatpush1.bf16.msra.mxu0 %v1266
        %1682 = vmatprep.subr.bf16.mxu0 %v1273
        %1683 = vmatpush1.bf16.msra.mxu0 %v1272
        %1684 = vmatprep.subr.bf16.mxu0 %v1279
        %1685 = vmatpush1.bf16.msra.mxu0 %v1278
        %1686 = vmatprep.subr.bf16.mxu0 %v1285
        %1687 = vmatpush1.bf16.msra.mxu0 %v1284
        %1688 = vmatprep.subr.bf16.mxu0 %v1291
        %1689 = vmatpush1.bf16.msra.mxu0 %v1290
        %1690 = vmatprep.subr.bf16.mxu0 %v1297
        %1691 = vmatpush1.bf16.msra.mxu0 %v1296
        %1692 = vmatprep.subr.bf16.mxu0 %v1303
        %1693 = vmatpush1.bf16.msra.mxu0 %v1302
        %1694 = vmatprep.subr.bf16.mxu0 %v1309
        %1695 = vmatpush1.bf16.msra.mxu0 %v1308
        %1696 = vmatprep.subr.bf16.mxu0 %v1315
        %1697 = vmatpush1.bf16.msra.mxu0 %v1314
        %1698 = vmatprep.subr.bf16.mxu0 %v1321
        %1699 = vmatpush1.bf16.msra.mxu0 %v1320
        %1700 = vmatprep.subr.bf16.mxu0 %v1327
        %1701 = vmatpush1.bf16.msra.mxu0 %v1326
        %1702 = vmatprep.subr.bf16.mxu0 %v1333
        %1703 = vmatpush1.bf16.msra.mxu0 %v1332
        %1704 = vmatprep.subr.bf16.mxu0 %v1339
        %1705 = vmatpush1.bf16.msra.mxu0 %v1338
        %1706 = vmatprep.subr.bf16.mxu0 %v1345
        %1707 = vmatpush1.bf16.msra.mxu0 %v1344
        %1708 = vmatprep.subr.bf16.mxu0 %v1351
        %1709 = vmatpush1.bf16.msra.mxu0 %v1350
        %1710 = vmatprep.subr.bf16.mxu0 %v1357
        %1711 = vmatpush1.bf16.msra.mxu0 %v1356
        %1712 = vmatprep.mubr.bf16.mxu0 %v863
        %1713 = vmatmul.mubr.bf16.gmra.mrb[0].mxu0 %v862
        %v1714 = vpop.f32.mrb[0].mxu0
        %v1715 = vadd.f32 0.0, %v1714
        %v1716 = vpop.f32.mrb[0].mxu0
        %v1717 = vadd.f32 0.0, %v1716
        %v1718 = vpop.f32.mrb[0].mxu0
        %v1719 = vadd.f32 0.0, %v1718
        %v1720 = vpop.f32.mrb[0].mxu0
        %v1721 = vadd.f32 0.0, %v1720
        %1722 = vmatprep.mubr.bf16.mxu0 %v865
        %1723 = vmatmul.mubr.bf16.gmra.mrb[0].mxu0 %v864
        %v1724 = vpop.f32.mrb[0].mxu0
        %v1725 = vadd.f32 0.0, %v1724
        %v1726 = vpop.f32.mrb[0].mxu0
        %v1727 = vadd.f32 0.0, %v1726
        %v1728 = vpop.f32.mrb[0].mxu0
        %v1729 = vadd.f32 0.0, %v1728
        %v1730 = vpop.f32.mrb[0].mxu0
        %v1731 = vadd.f32 0.0, %v1730
        %1732 = vmatprep.mubr.bf16.mxu0 %v867
        %1733 = vmatmul.mubr.bf16.gmra.mrb[0].mxu0 %v866
        %v1734 = vpop.f32.mrb[0].mxu0
        %v1735 = vadd.f32 0.0, %v1734
        %v1736 = vpop.f32.mrb[0].mxu0
        %v1737 = vadd.f32 0.0, %v1736
        %v1738 = vpop.f32.mrb[0].mxu0
        %v1739 = vadd.f32 0.0, %v1738
        %v1740 = vpop.f32.mrb[0].mxu0
        %v1741 = vadd.f32 0.0, %v1740
        %1742 = vmatprep.mubr.bf16.mxu0 %v869
        %1743 = vmatmul.mubr.bf16.gmra.mrb[0].mxu0 %v868
        %v1744 = vpop.f32.mrb[0].mxu0
        %v1745 = vadd.f32 0.0, %v1744
        %v1746 = vpop.f32.mrb[0].mxu0
        %v1747 = vadd.f32 0.0, %v1746
        %v1748 = vpop.f32.mrb[0].mxu0
        %v1749 = vadd.f32 0.0, %v1748
        %v1750 = vpop.f32.mrb[0].mxu0
        %v1751 = vadd.f32 0.0, %v1750
        %1752 = vmatprep.mubr.bf16.mxu0 %v871
        %1753 = vmatmul.mubr.bf16.gmra.mrb[0].mxu0 %v870
        %v1754 = vpop.f32.mrb[0].mxu0
        %v1755 = vadd.f32 0.0, %v1754
        %v1756 = vpop.f32.mrb[0].mxu0
        %v1757 = vadd.f32 0.0, %v1756
        %v1758 = vpop.f32.mrb[0].mxu0
        %v1759 = vadd.f32 0.0, %v1758
        %v1760 = vpop.f32.mrb[0].mxu0
        %v1761 = vadd.f32 0.0, %v1760
        %1762 = vmatprep.mubr.bf16.mxu0 %v873
        %1763 = vmatmul.mubr.bf16.gmra.mrb[0].mxu0 %v872
        %v1764 = vpop.f32.mrb[0].mxu0
        %v1765 = vadd.f32 0.0, %v1764
        %v1766 = vpop.f32.mrb[0].mxu0
        %v1767 = vadd.f32 0.0, %v1766
        %v1768 = vpop.f32.mrb[0].mxu0
        %v1769 = vadd.f32 0.0, %v1768
        %v1770 = vpop.f32.mrb[0].mxu0
        %v1771 = vadd.f32 0.0, %v1770
        %1772 = vmatprep.mubr.bf16.mxu0 %v875
        %1773 = vmatmul.mubr.bf16.gmra.mrb[0].mxu0 %v874
        %v1774 = vpop.f32.mrb[0].mxu0
        %v1775 = vadd.f32 0.0, %v1774
        %v1776 = vpop.f32.mrb[0].mxu0
        %v1777 = vadd.f32 0.0, %v1776
        %v1778 = vpop.f32.mrb[0].mxu0
        %v1779 = vadd.f32 0.0, %v1778
        %v1780 = vpop.f32.mrb[0].mxu0
        %v1781 = vadd.f32 0.0, %v1780
        %1782 = vmatprep.mubr.bf16.mxu0 %v877
        %1783 = vmatmul.mubr.bf16.gmra.mrb[0].mxu0 %v876
        %v1784 = vpop.f32.mrb[0].mxu0
        %v1785 = vadd.f32 0.0, %v1784
        %v1786 = vpop.f32.mrb[0].mxu0
        %v1787 = vadd.f32 0.0, %v1786
        %v1788 = vpop.f32.mrb[0].mxu0
        %v1789 = vadd.f32 0.0, %v1788
        %v1790 = vpop.f32.mrb[0].mxu0
        %v1791 = vadd.f32 0.0, %v1790
        %1792 = vdwg.mxu0
        %v1793 = vld [vmem:[%s417] sm:$0xff]
        %v1794 = vld [vmem:[%s417 + $0x8] sm:$0xff]
        %v1795 = vld [vmem:[%s417 + $0x10] sm:$0xff]
        %v1796 = vld [vmem:[%s417 + $0x18] sm:$0xff]
        %v1797 = vld [vmem:[%s417 + $0x20] sm:$0xff]
        %v1798 = vld [vmem:[%s417 + $0x28] sm:$0xff]
        %v1799 = vld [vmem:[%s417 + $0x30] sm:$0xff]
        %v1800 = vld [vmem:[%s417 + $0x38] sm:$0xff]
        %v1801 = vld [vmem:[%s417 + $0x40] sm:$0xff]
        %v1802 = vld [vmem:[%s417 + $0x48] sm:$0xff]
        %v1803 = vld [vmem:[%s417 + $0x50] sm:$0xff]
        %v1804 = vld [vmem:[%s417 + $0x58] sm:$0xff]
        %v1805 = vld [vmem:[%s417 + $0x60] sm:$0xff]
        %v1806 = vld [vmem:[%s417 + $0x68] sm:$0xff]
        %v1807 = vld [vmem:[%s417 + $0x70] sm:$0xff]
        %v1808 = vld [vmem:[%s417 + $0x78] sm:$0xff]
        %v1809 = vld [vmem:[%s426] sm:$0xff]
        %v1810 = vld [vmem:[%s426 + $0x8] sm:$0xff]
        %v1811 = vld [vmem:[%s426 + $0x10] sm:$0xff]
        %v1812 = vld [vmem:[%s426 + $0x18] sm:$0xff]
        %v1813 = vld [vmem:[%s426 + $0x20] sm:$0xff]
        %v1814 = vld [vmem:[%s426 + $0x28] sm:$0xff]
        %v1815 = vld [vmem:[%s426 + $0x30] sm:$0xff]
        %v1816 = vld [vmem:[%s426 + $0x38] sm:$0xff]
        %v1817 = vld [vmem:[%s426 + $0x40] sm:$0xff]
        %v1818 = vld [vmem:[%s426 + $0x48] sm:$0xff]
        %v1819 = vld [vmem:[%s426 + $0x50] sm:$0xff]
        %v1820 = vld [vmem:[%s426 + $0x58] sm:$0xff]
        %v1821 = vld [vmem:[%s426 + $0x60] sm:$0xff]
        %v1822 = vld [vmem:[%s426 + $0x68] sm:$0xff]
        %v1823 = vld [vmem:[%s426 + $0x70] sm:$0xff]
        %v1824 = vld [vmem:[%s426 + $0x78] sm:$0xff]
        %v1825 = vsub.f32 0.0, %v1489
        %v1826 = vsub.f32 0.0, %v1493
        %v1827 = vsub.f32 0.0, %v1499
        %v1828 = vsub.f32 0.0, %v1503
        %v1829 = vsub.f32 0.0, %v1509
        %v1830 = vsub.f32 0.0, %v1513
        %v1831 = vsub.f32 0.0, %v1519
        %v1832 = vsub.f32 0.0, %v1523
        %v1833 = vsub.f32 0.0, %v1529
        %v1834 = vsub.f32 0.0, %v1533
        %v1835 = vsub.f32 0.0, %v1539
        %v1836 = vsub.f32 0.0, %v1543
        %v1837 = vsub.f32 0.0, %v1549
        %v1838 = vsub.f32 0.0, %v1553
        %v1839 = vsub.f32 0.0, %v1559
        %v1840 = vsub.f32 0.0, %v1563
        %1857 = vrot.lane.b32.xlu0 %v1825, 64
        %v1858 = vpop.permute.xlu0 %1857
        %1859 = vrot.lane.b32.xlu0 %v1826, 64
        %v1860 = vpop.permute.xlu0 %1859
        %1861 = vrot.lane.b32.xlu0 %v1827, 64
        %v1862 = vpop.permute.xlu0 %1861
        %1863 = vrot.lane.b32.xlu0 %v1828, 64
        %v1864 = vpop.permute.xlu0 %1863
        %1865 = vrot.lane.b32.xlu0 %v1829, 64
        %v1866 = vpop.permute.xlu0 %1865
        %1867 = vrot.lane.b32.xlu0 %v1830, 64
        %v1868 = vpop.permute.xlu0 %1867
        %1869 = vrot.lane.b32.xlu0 %v1831, 64
        %v1870 = vpop.permute.xlu0 %1869
        %1871 = vrot.lane.b32.xlu0 %v1832, 64
        %v1872 = vpop.permute.xlu0 %1871
        %1873 = vrot.lane.b32.xlu0 %v1833, 64
        %v1874 = vpop.permute.xlu0 %1873
        %1875 = vrot.lane.b32.xlu0 %v1834, 64
        %v1876 = vpop.permute.xlu0 %1875
        %1877 = vrot.lane.b32.xlu0 %v1835, 64
        %v1878 = vpop.permute.xlu0 %1877
        %1879 = vrot.lane.b32.xlu0 %v1836, 64
        %v1880 = vpop.permute.xlu0 %1879
        %1881 = vrot.lane.b32.xlu0 %v1837, 64
        %v1882 = vpop.permute.xlu0 %1881
        %1883 = vrot.lane.b32.xlu0 %v1838, 64
        %v1884 = vpop.permute.xlu0 %1883
        %1885 = vrot.lane.b32.xlu0 %v1839, 64
        %v1886 = vpop.permute.xlu0 %1885
        %1887 = vrot.lane.b32.xlu0 %v1840, 64
        %v1888 = vpop.permute.xlu0 %1887
        %1921 = vrot.lane.b32.xlu0 %v1489, 64
        %v1922 = vpop.permute.xlu0 %1921
        %1923 = vrot.lane.b32.xlu0 %v1493, 64
        %v1924 = vpop.permute.xlu0 %1923
        %1925 = vrot.lane.b32.xlu0 %v1499, 64
        %v1926 = vpop.permute.xlu0 %1925
        %1927 = vrot.lane.b32.xlu0 %v1503, 64
        %v1928 = vpop.permute.xlu0 %1927
        %1929 = vrot.lane.b32.xlu0 %v1509, 64
        %v1930 = vpop.permute.xlu0 %1929
        %1931 = vrot.lane.b32.xlu0 %v1513, 64
        %v1932 = vpop.permute.xlu0 %1931
        %1933 = vrot.lane.b32.xlu0 %v1519, 64
        %v1934 = vpop.permute.xlu0 %1933
        %1935 = vrot.lane.b32.xlu0 %v1523, 64
        %v1936 = vpop.permute.xlu0 %1935
        %1937 = vrot.lane.b32.xlu0 %v1529, 64
        %v1938 = vpop.permute.xlu0 %1937
        %1939 = vrot.lane.b32.xlu0 %v1533, 64
        %v1940 = vpop.permute.xlu0 %1939
        %1941 = vrot.lane.b32.xlu0 %v1539, 64
        %v1942 = vpop.permute.xlu0 %1941
        %1943 = vrot.lane.b32.xlu0 %v1543, 64
        %v1944 = vpop.permute.xlu0 %1943
        %1945 = vrot.lane.b32.xlu0 %v1549, 64
        %v1946 = vpop.permute.xlu0 %1945
        %1947 = vrot.lane.b32.xlu0 %v1553, 64
        %v1948 = vpop.permute.xlu0 %1947
        %1949 = vrot.lane.b32.xlu0 %v1559, 64
        %v1950 = vpop.permute.xlu0 %1949
        %1951 = vrot.lane.b32.xlu0 %v1563, 64
        %v1952 = vpop.permute.xlu0 %1951
        %vm1969 = vcmask 523264
        %v1970 = vsel %vm1969, %v1858, %v1922
        %v1971 = vsel %vm1969, %v1860, %v1924
        %v1972 = vsel %vm1969, %v1862, %v1926
        %v1973 = vsel %vm1969, %v1864, %v1928
        %v1974 = vsel %vm1969, %v1866, %v1930
        %v1975 = vsel %vm1969, %v1868, %v1932
        %v1976 = vsel %vm1969, %v1870, %v1934
        %v1977 = vsel %vm1969, %v1872, %v1936
        %v1978 = vsel %vm1969, %v1874, %v1938
        %v1979 = vsel %vm1969, %v1876, %v1940
        %v1980 = vsel %vm1969, %v1878, %v1942
        %v1981 = vsel %vm1969, %v1880, %v1944
        %v1982 = vsel %vm1969, %v1882, %v1946
        %v1983 = vsel %vm1969, %v1884, %v1948
        %v1984 = vsel %vm1969, %v1886, %v1950
        %v1985 = vsel %vm1969, %v1888, %v1952
        %v1986 = vsub.f32 0.0, %v1602
        %v1987 = vsub.f32 0.0, %v1606
        %v1988 = vsub.f32 0.0, %v1612
        %v1989 = vsub.f32 0.0, %v1616
        %v1990 = vsub.f32 0.0, %v1622
        %v1991 = vsub.f32 0.0, %v1626
        %v1992 = vsub.f32 0.0, %v1632
        %v1993 = vsub.f32 0.0, %v1636
        %v1994 = vsub.f32 0.0, %v1642
        %v1995 = vsub.f32 0.0, %v1646
        %v1996 = vsub.f32 0.0, %v1652
        %v1997 = vsub.f32 0.0, %v1656
        %v1998 = vsub.f32 0.0, %v1662
        %v1999 = vsub.f32 0.0, %v1666
        %v2000 = vsub.f32 0.0, %v1672
        %v2001 = vsub.f32 0.0, %v1676
        %2018 = vrot.lane.b32.xlu0 %v1986, 64
        %v2019 = vpop.permute.xlu0 %2018
        %2020 = vrot.lane.b32.xlu0 %v1987, 64
        %v2021 = vpop.permute.xlu0 %2020
        %2022 = vrot.lane.b32.xlu0 %v1988, 64
        %v2023 = vpop.permute.xlu0 %2022
        %2024 = vrot.lane.b32.xlu0 %v1989, 64
        %v2025 = vpop.permute.xlu0 %2024
        %2026 = vrot.lane.b32.xlu0 %v1990, 64
        %v2027 = vpop.permute.xlu0 %2026
        %2028 = vrot.lane.b32.xlu0 %v1991, 64
        %v2029 = vpop.permute.xlu0 %2028
        %2030 = vrot.lane.b32.xlu0 %v1992, 64
        %v2031 = vpop.permute.xlu0 %2030
        %2032 = vrot.lane.b32.xlu0 %v1993, 64
        %v2033 = vpop.permute.xlu0 %2032
        %2034 = vrot.lane.b32.xlu0 %v1994, 64
        %v2035 = vpop.permute.xlu0 %2034
        %2036 = vrot.lane.b32.xlu0 %v1995, 64
        %v2037 = vpop.permute.xlu0 %2036
        %2038 = vrot.lane.b32.xlu0 %v1996, 64
        %v2039 = vpop.permute.xlu0 %2038
        %2040 = vrot.lane.b32.xlu0 %v1997, 64
        %v2041 = vpop.permute.xlu0 %2040
        %2042 = vrot.lane.b32.xlu0 %v1998, 64
        %v2043 = vpop.permute.xlu0 %2042
        %2044 = vrot.lane.b32.xlu0 %v1999, 64
        %v2045 = vpop.permute.xlu0 %2044
        %2046 = vrot.lane.b32.xlu0 %v2000, 64
        %v2047 = vpop.permute.xlu0 %2046
        %2048 = vrot.lane.b32.xlu0 %v2001, 64
        %v2049 = vpop.permute.xlu0 %2048
        %2082 = vrot.lane.b32.xlu0 %v1602, 64
        %v2083 = vpop.permute.xlu0 %2082
        %2084 = vrot.lane.b32.xlu0 %v1606, 64
        %v2085 = vpop.permute.xlu0 %2084
        %2086 = vrot.lane.b32.xlu0 %v1612, 64
        %v2087 = vpop.permute.xlu0 %2086
        %2088 = vrot.lane.b32.xlu0 %v1616, 64
        %v2089 = vpop.permute.xlu0 %2088
        %2090 = vrot.lane.b32.xlu0 %v1622, 64
        %v2091 = vpop.permute.xlu0 %2090
        %2092 = vrot.lane.b32.xlu0 %v1626, 64
        %v2093 = vpop.permute.xlu0 %2092
        %2094 = vrot.lane.b32.xlu0 %v1632, 64
        %v2095 = vpop.permute.xlu0 %2094
        %2096 = vrot.lane.b32.xlu0 %v1636, 64
        %v2097 = vpop.permute.xlu0 %2096
        %2098 = vrot.lane.b32.xlu0 %v1642, 64
        %v2099 = vpop.permute.xlu0 %2098
        %2100 = vrot.lane.b32.xlu0 %v1646, 64
        %v2101 = vpop.permute.xlu0 %2100
        %2102 = vrot.lane.b32.xlu0 %v1652, 64
        %v2103 = vpop.permute.xlu0 %2102
        %2104 = vrot.lane.b32.xlu0 %v1656, 64
        %v2105 = vpop.permute.xlu0 %2104
        %2106 = vrot.lane.b32.xlu0 %v1662, 64
        %v2107 = vpop.permute.xlu0 %2106
        %2108 = vrot.lane.b32.xlu0 %v1666, 64
        %v2109 = vpop.permute.xlu0 %2108
        %2110 = vrot.lane.b32.xlu0 %v1672, 64
        %v2111 = vpop.permute.xlu0 %2110
        %2112 = vrot.lane.b32.xlu0 %v1676, 64
        %v2113 = vpop.permute.xlu0 %2112
        %v2130 = vsel %vm1969, %v2019, %v2083
        %v2131 = vsel %vm1969, %v2021, %v2085
        %v2132 = vsel %vm1969, %v2023, %v2087
        %v2133 = vsel %vm1969, %v2025, %v2089
        %v2134 = vsel %vm1969, %v2027, %v2091
        %v2135 = vsel %vm1969, %v2029, %v2093
        %v2136 = vsel %vm1969, %v2031, %v2095
        %v2137 = vsel %vm1969, %v2033, %v2097
        %v2138 = vsel %vm1969, %v2035, %v2099
        %v2139 = vsel %vm1969, %v2037, %v2101
        %v2140 = vsel %vm1969, %v2039, %v2103
        %v2141 = vsel %vm1969, %v2041, %v2105
        %v2142 = vsel %vm1969, %v2043, %v2107
        %v2143 = vsel %vm1969, %v2045, %v2109
        %v2144 = vsel %vm1969, %v2047, %v2111
        %v2145 = vsel %vm1969, %v2049, %v2113
        %v2146 = vmul.f32 %v1489, %v1793
        %v2147 = vmul.f32 %v1493, %v1794
        %v2148 = vmul.f32 %v1499, %v1795
        %v2149 = vmul.f32 %v1503, %v1796
        %v2150 = vmul.f32 %v1509, %v1797
        %v2151 = vmul.f32 %v1513, %v1798
        %v2152 = vmul.f32 %v1519, %v1799
        %v2153 = vmul.f32 %v1523, %v1800
        %v2154 = vmul.f32 %v1529, %v1801
        %v2155 = vmul.f32 %v1533, %v1802
        %v2156 = vmul.f32 %v1539, %v1803
        %v2157 = vmul.f32 %v1543, %v1804
        %v2158 = vmul.f32 %v1549, %v1805
        %v2159 = vmul.f32 %v1553, %v1806
        %v2160 = vmul.f32 %v1559, %v1807
        %v2161 = vmul.f32 %v1563, %v1808
        %v2162 = vmul.f32 %v1970, %v1809
        %v2163 = vmul.f32 %v1971, %v1810
        %v2164 = vmul.f32 %v1972, %v1811
        %v2165 = vmul.f32 %v1973, %v1812
        %v2166 = vmul.f32 %v1974, %v1813
        %v2167 = vmul.f32 %v1975, %v1814
        %v2168 = vmul.f32 %v1976, %v1815
        %v2169 = vmul.f32 %v1977, %v1816
        %v2170 = vmul.f32 %v1978, %v1817
        %v2171 = vmul.f32 %v1979, %v1818
        %v2172 = vmul.f32 %v1980, %v1819
        %v2173 = vmul.f32 %v1981, %v1820
        %v2174 = vmul.f32 %v1982, %v1821
        %v2175 = vmul.f32 %v1983, %v1822
        %v2176 = vmul.f32 %v1984, %v1823
        %v2177 = vmul.f32 %v1985, %v1824
        %v2178 = vadd.f32 %v2146, %v2162
        %v2179 = vadd.f32 %v2147, %v2163
        %v2180 = vadd.f32 %v2148, %v2164
        %v2181 = vadd.f32 %v2149, %v2165
        %v2182 = vadd.f32 %v2150, %v2166
        %v2183 = vadd.f32 %v2151, %v2167
        %v2184 = vadd.f32 %v2152, %v2168
        %v2185 = vadd.f32 %v2153, %v2169
        %v2186 = vadd.f32 %v2154, %v2170
        %v2187 = vadd.f32 %v2155, %v2171
        %v2188 = vadd.f32 %v2156, %v2172
        %v2189 = vadd.f32 %v2157, %v2173
        %v2190 = vadd.f32 %v2158, %v2174
        %v2191 = vadd.f32 %v2159, %v2175
        %v2192 = vadd.f32 %v2160, %v2176
        %v2193 = vadd.f32 %v2161, %v2177
        %v2194 = vpack.c.bf16 %v2179, %v2178
        %v2195 = vpack.c.bf16 %v2181, %v2180
        %v2196 = vpack.c.bf16 %v2183, %v2182
        %v2197 = vpack.c.bf16 %v2185, %v2184
        %v2198 = vpack.c.bf16 %v2187, %v2186
        %v2199 = vpack.c.bf16 %v2189, %v2188
        %v2200 = vpack.c.bf16 %v2191, %v2190
        %v2201 = vpack.c.bf16 %v2193, %v2192
        %v2210 = vunpack.c.l.b16 %v2194
        %v2211 = vunpack.c.h.b16 %v2194
        %v2212 = vunpack.c.l.b16 %v2195
        %v2213 = vunpack.c.h.b16 %v2195
        %v2214 = vunpack.c.l.b16 %v2196
        %v2215 = vunpack.c.h.b16 %v2196
        %v2216 = vunpack.c.l.b16 %v2197
        %v2217 = vunpack.c.h.b16 %v2197
        %v2218 = vunpack.c.l.b16 %v2198
        %v2219 = vunpack.c.h.b16 %v2198
        %v2220 = vunpack.c.l.b16 %v2199
        %v2221 = vunpack.c.h.b16 %v2199
        %v2222 = vunpack.c.l.b16 %v2200
        %v2223 = vunpack.c.h.b16 %v2200
        %v2224 = vunpack.c.l.b16 %v2201
        %v2225 = vunpack.c.h.b16 %v2201
        %v2226 = vpack.c.b16 %v2210, %v2210
        %v2227 = vpack.c.b16 %v2211, %v2211
        %v2228 = vpack.c.b16 %v2212, %v2212
        %v2229 = vpack.c.b16 %v2213, %v2213
        %v2230 = vpack.c.b16 %v2214, %v2214
        %v2231 = vpack.c.b16 %v2215, %v2215
        %v2232 = vpack.c.b16 %v2216, %v2216
        %v2233 = vpack.c.b16 %v2217, %v2217
        %v2234 = vpack.c.b16 %v2218, %v2218
        %v2235 = vpack.c.b16 %v2219, %v2219
        %v2236 = vpack.c.b16 %v2220, %v2220
        %v2237 = vpack.c.b16 %v2221, %v2221
        %v2238 = vpack.c.b16 %v2222, %v2222
        %v2239 = vpack.c.b16 %v2223, %v2223
        %v2240 = vpack.c.b16 %v2224, %v2224
        %v2241 = vpack.c.b16 %v2225, %v2225
        %2258 = vst [vmem:[%s464] sm:$0xf] %v2226
        %2259 = vst [vmem:[%s464 + $0x8] sm:$0xf] %v2227
        %2260 = vst [vmem:[%s464 + $0x10] sm:$0xf] %v2228
        %2261 = vst [vmem:[%s464 + $0x18] sm:$0xf] %v2229
        %2262 = vst [vmem:[%s464 + $0x20] sm:$0xf] %v2230
        %2263 = vst [vmem:[%s464 + $0x28] sm:$0xf] %v2231
        %2264 = vst [vmem:[%s464 + $0x30] sm:$0xf] %v2232
        %2265 = vst [vmem:[%s464 + $0x38] sm:$0xf] %v2233
        %2266 = vst [vmem:[%s464 + $0x40] sm:$0xf] %v2234
        %2267 = vst [vmem:[%s464 + $0x48] sm:$0xf] %v2235
        %2268 = vst [vmem:[%s464 + $0x50] sm:$0xf] %v2236
        %2269 = vst [vmem:[%s464 + $0x58] sm:$0xf] %v2237
        %2270 = vst [vmem:[%s464 + $0x60] sm:$0xf] %v2238
        %2271 = vst [vmem:[%s464 + $0x68] sm:$0xf] %v2239
        %2272 = vst [vmem:[%s464 + $0x70] sm:$0xf] %v2240
        %2273 = vst [vmem:[%s464 + $0x78] sm:$0xf] %v2241
        %v2274 = vmul.f32 %v1602, %v1793
        %v2275 = vmul.f32 %v1606, %v1794
        %v2276 = vmul.f32 %v1612, %v1795
        %v2277 = vmul.f32 %v1616, %v1796
        %v2278 = vmul.f32 %v1622, %v1797
        %v2279 = vmul.f32 %v1626, %v1798
        %v2280 = vmul.f32 %v1632, %v1799
        %v2281 = vmul.f32 %v1636, %v1800
        %v2282 = vmul.f32 %v1642, %v1801
        %v2283 = vmul.f32 %v1646, %v1802
        %v2284 = vmul.f32 %v1652, %v1803
        %v2285 = vmul.f32 %v1656, %v1804
        %v2286 = vmul.f32 %v1662, %v1805
        %v2287 = vmul.f32 %v1666, %v1806
        %v2288 = vmul.f32 %v1672, %v1807
        %v2289 = vmul.f32 %v1676, %v1808
        %v2290 = vmul.f32 %v2130, %v1809
        %v2291 = vmul.f32 %v2131, %v1810
        %v2292 = vmul.f32 %v2132, %v1811
        %v2293 = vmul.f32 %v2133, %v1812
        %v2294 = vmul.f32 %v2134, %v1813
        %v2295 = vmul.f32 %v2135, %v1814
        %v2296 = vmul.f32 %v2136, %v1815
        %v2297 = vmul.f32 %v2137, %v1816
        %v2298 = vmul.f32 %v2138, %v1817
        %v2299 = vmul.f32 %v2139, %v1818
        %v2300 = vmul.f32 %v2140, %v1819
        %v2301 = vmul.f32 %v2141, %v1820
        %v2302 = vmul.f32 %v2142, %v1821
        %v2303 = vmul.f32 %v2143, %v1822
        %v2304 = vmul.f32 %v2144, %v1823
        %v2305 = vmul.f32 %v2145, %v1824
        %v2306 = vadd.f32 %v2274, %v2290
        %v2307 = vadd.f32 %v2275, %v2291
        %v2308 = vadd.f32 %v2276, %v2292
        %v2309 = vadd.f32 %v2277, %v2293
        %v2310 = vadd.f32 %v2278, %v2294
        %v2311 = vadd.f32 %v2279, %v2295
        %v2312 = vadd.f32 %v2280, %v2296
        %v2313 = vadd.f32 %v2281, %v2297
        %v2314 = vadd.f32 %v2282, %v2298
        %v2315 = vadd.f32 %v2283, %v2299
        %v2316 = vadd.f32 %v2284, %v2300
        %v2317 = vadd.f32 %v2285, %v2301
        %v2318 = vadd.f32 %v2286, %v2302
        %v2319 = vadd.f32 %v2287, %v2303
        %v2320 = vadd.f32 %v2288, %v2304
        %v2321 = vadd.f32 %v2289, %v2305
        %v2322 = vpack.c.bf16 %v2307, %v2306
        %v2323 = vpack.c.bf16 %v2309, %v2308
        %v2324 = vpack.c.bf16 %v2311, %v2310
        %v2325 = vpack.c.bf16 %v2313, %v2312
        %v2326 = vpack.c.bf16 %v2315, %v2314
        %v2327 = vpack.c.bf16 %v2317, %v2316
        %v2328 = vpack.c.bf16 %v2319, %v2318
        %v2329 = vpack.c.bf16 %v2321, %v2320
        %v2338 = vunpack.c.l.b16 %v2322
        %v2339 = vunpack.c.h.b16 %v2322
        %v2340 = vunpack.c.l.b16 %v2323
        %v2341 = vunpack.c.h.b16 %v2323
        %v2342 = vunpack.c.l.b16 %v2324
        %v2343 = vunpack.c.h.b16 %v2324
        %v2344 = vunpack.c.l.b16 %v2325
        %v2345 = vunpack.c.h.b16 %v2325
        %v2346 = vunpack.c.l.b16 %v2326
        %v2347 = vunpack.c.h.b16 %v2326
        %v2348 = vunpack.c.l.b16 %v2327
        %v2349 = vunpack.c.h.b16 %v2327
        %v2350 = vunpack.c.l.b16 %v2328
        %v2351 = vunpack.c.h.b16 %v2328
        %v2352 = vunpack.c.l.b16 %v2329
        %v2353 = vunpack.c.h.b16 %v2329
        %v2354 = vpack.c.b16 %v2338, %v2338
        %v2355 = vpack.c.b16 %v2339, %v2339
        %v2356 = vpack.c.b16 %v2340, %v2340
        %v2357 = vpack.c.b16 %v2341, %v2341
        %v2358 = vpack.c.b16 %v2342, %v2342
        %v2359 = vpack.c.b16 %v2343, %v2343
        %v2360 = vpack.c.b16 %v2344, %v2344
        %v2361 = vpack.c.b16 %v2345, %v2345
        %v2362 = vpack.c.b16 %v2346, %v2346
        %v2363 = vpack.c.b16 %v2347, %v2347
        %v2364 = vpack.c.b16 %v2348, %v2348
        %v2365 = vpack.c.b16 %v2349, %v2349
        %v2366 = vpack.c.b16 %v2350, %v2350
        %v2367 = vpack.c.b16 %v2351, %v2351
        %v2368 = vpack.c.b16 %v2352, %v2352
        %v2369 = vpack.c.b16 %v2353, %v2353
        %2386 = vst [vmem:[%s471] sm:$0xf] %v2354
        %2387 = vst [vmem:[%s471 + $0x8] sm:$0xf] %v2355
        %2388 = vst [vmem:[%s471 + $0x10] sm:$0xf] %v2356
        %2389 = vst [vmem:[%s471 + $0x18] sm:$0xf] %v2357
        %2390 = vst [vmem:[%s471 + $0x20] sm:$0xf] %v2358
        %2391 = vst [vmem:[%s471 + $0x28] sm:$0xf] %v2359
        %2392 = vst [vmem:[%s471 + $0x30] sm:$0xf] %v2360
        %2393 = vst [vmem:[%s471 + $0x38] sm:$0xf] %v2361
        %2394 = vst [vmem:[%s471 + $0x40] sm:$0xf] %v2362
        %2395 = vst [vmem:[%s471 + $0x48] sm:$0xf] %v2363
        %2396 = vst [vmem:[%s471 + $0x50] sm:$0xf] %v2364
        %2397 = vst [vmem:[%s471 + $0x58] sm:$0xf] %v2365
        %2398 = vst [vmem:[%s471 + $0x60] sm:$0xf] %v2366
        %2399 = vst [vmem:[%s471 + $0x68] sm:$0xf] %v2367
        %2400 = vst [vmem:[%s471 + $0x70] sm:$0xf] %v2368
        %2401 = vst [vmem:[%s471 + $0x78] sm:$0xf] %v2369
        %v2402 = vsub.f32 0.0, %v1491
        %v2403 = vsub.f32 0.0, %v1495
        %v2404 = vsub.f32 0.0, %v1501
        %v2405 = vsub.f32 0.0, %v1505
        %v2406 = vsub.f32 0.0, %v1511
        %v2407 = vsub.f32 0.0, %v1515
        %v2408 = vsub.f32 0.0, %v1521
        %v2409 = vsub.f32 0.0, %v1525
        %v2410 = vsub.f32 0.0, %v1531
        %v2411 = vsub.f32 0.0, %v1535
        %v2412 = vsub.f32 0.0, %v1541
        %v2413 = vsub.f32 0.0, %v1545
        %v2414 = vsub.f32 0.0, %v1551
        %v2415 = vsub.f32 0.0, %v1555
        %v2416 = vsub.f32 0.0, %v1561
        %v2417 = vsub.f32 0.0, %v1565
        %2434 = vrot.lane.b32.xlu0 %v2402, 64
        %v2435 = vpop.permute.xlu0 %2434
        %2436 = vrot.lane.b32.xlu0 %v2403, 64
        %v2437 = vpop.permute.xlu0 %2436
        %2438 = vrot.lane.b32.xlu0 %v2404, 64
        %v2439 = vpop.permute.xlu0 %2438
        %2440 = vrot.lane.b32.xlu0 %v2405, 64
        %v2441 = vpop.permute.xlu0 %2440
        %2442 = vrot.lane.b32.xlu0 %v2406, 64
        %v2443 = vpop.permute.xlu0 %2442
        %2444 = vrot.lane.b32.xlu0 %v2407, 64
        %v2445 = vpop.permute.xlu0 %2444
        %2446 = vrot.lane.b32.xlu0 %v2408, 64
        %v2447 = vpop.permute.xlu0 %2446
        %2448 = vrot.lane.b32.xlu0 %v2409, 64
        %v2449 = vpop.permute.xlu0 %2448
        %2450 = vrot.lane.b32.xlu0 %v2410, 64
        %v2451 = vpop.permute.xlu0 %2450
        %2452 = vrot.lane.b32.xlu0 %v2411, 64
        %v2453 = vpop.permute.xlu0 %2452
        %2454 = vrot.lane.b32.xlu0 %v2412, 64
        %v2455 = vpop.permute.xlu0 %2454
        %2456 = vrot.lane.b32.xlu0 %v2413, 64
        %v2457 = vpop.permute.xlu0 %2456
        %2458 = vrot.lane.b32.xlu0 %v2414, 64
        %v2459 = vpop.permute.xlu0 %2458
        %2460 = vrot.lane.b32.xlu0 %v2415, 64
        %v2461 = vpop.permute.xlu0 %2460
        %2462 = vrot.lane.b32.xlu0 %v2416, 64
        %v2463 = vpop.permute.xlu0 %2462
        %2464 = vrot.lane.b32.xlu0 %v2417, 64
        %v2465 = vpop.permute.xlu0 %2464
        %2498 = vrot.lane.b32.xlu0 %v1491, 64
        %v2499 = vpop.permute.xlu0 %2498
        %2500 = vrot.lane.b32.xlu0 %v1495, 64
        %v2501 = vpop.permute.xlu0 %2500
        %2502 = vrot.lane.b32.xlu0 %v1501, 64
        %v2503 = vpop.permute.xlu0 %2502
        %2504 = vrot.lane.b32.xlu0 %v1505, 64
        %v2505 = vpop.permute.xlu0 %2504
        %2506 = vrot.lane.b32.xlu0 %v1511, 64
        %v2507 = vpop.permute.xlu0 %2506
        %2508 = vrot.lane.b32.xlu0 %v1515, 64
        %v2509 = vpop.permute.xlu0 %2508
        %2510 = vrot.lane.b32.xlu0 %v1521, 64
        %v2511 = vpop.permute.xlu0 %2510
        %2512 = vrot.lane.b32.xlu0 %v1525, 64
        %v2513 = vpop.permute.xlu0 %2512
        %2514 = vrot.lane.b32.xlu0 %v1531, 64
        %v2515 = vpop.permute.xlu0 %2514
        %2516 = vrot.lane.b32.xlu0 %v1535, 64
        %v2517 = vpop.permute.xlu0 %2516
        %2518 = vrot.lane.b32.xlu0 %v1541, 64
        %v2519 = vpop.permute.xlu0 %2518
        %2520 = vrot.lane.b32.xlu0 %v1545, 64
        %v2521 = vpop.permute.xlu0 %2520
        %2522 = vrot.lane.b32.xlu0 %v1551, 64
        %v2523 = vpop.permute.xlu0 %2522
        %2524 = vrot.lane.b32.xlu0 %v1555, 64
        %v2525 = vpop.permute.xlu0 %2524
        %2526 = vrot.lane.b32.xlu0 %v1561, 64
        %v2527 = vpop.permute.xlu0 %2526
        %2528 = vrot.lane.b32.xlu0 %v1565, 64
        %v2529 = vpop.permute.xlu0 %2528
        %v2546 = vsel %vm1969, %v2435, %v2499
        %v2547 = vsel %vm1969, %v2437, %v2501
        %v2548 = vsel %vm1969, %v2439, %v2503
        %v2549 = vsel %vm1969, %v2441, %v2505
        %v2550 = vsel %vm1969, %v2443, %v2507
        %v2551 = vsel %vm1969, %v2445, %v2509
        %v2552 = vsel %vm1969, %v2447, %v2511
        %v2553 = vsel %vm1969, %v2449, %v2513
        %v2554 = vsel %vm1969, %v2451, %v2515
        %v2555 = vsel %vm1969, %v2453, %v2517
        %v2556 = vsel %vm1969, %v2455, %v2519
        %v2557 = vsel %vm1969, %v2457, %v2521
        %v2558 = vsel %vm1969, %v2459, %v2523
        %v2559 = vsel %vm1969, %v2461, %v2525
        %v2560 = vsel %vm1969, %v2463, %v2527
        %v2561 = vsel %vm1969, %v2465, %v2529
        %v2562 = vsub.f32 0.0, %v1604
        %v2563 = vsub.f32 0.0, %v1608
        %v2564 = vsub.f32 0.0, %v1614
        %v2565 = vsub.f32 0.0, %v1618
        %v2566 = vsub.f32 0.0, %v1624
        %v2567 = vsub.f32 0.0, %v1628
        %v2568 = vsub.f32 0.0, %v1634
        %v2569 = vsub.f32 0.0, %v1638
        %v2570 = vsub.f32 0.0, %v1644
        %v2571 = vsub.f32 0.0, %v1648
        %v2572 = vsub.f32 0.0, %v1654
        %v2573 = vsub.f32 0.0, %v1658
        %v2574 = vsub.f32 0.0, %v1664
        %v2575 = vsub.f32 0.0, %v1668
        %v2576 = vsub.f32 0.0, %v1674
        %v2577 = vsub.f32 0.0, %v1678
        %2594 = vrot.lane.b32.xlu0 %v2562, 64
        %v2595 = vpop.permute.xlu0 %2594
        %2596 = vrot.lane.b32.xlu0 %v2563, 64
        %v2597 = vpop.permute.xlu0 %2596
        %2598 = vrot.lane.b32.xlu0 %v2564, 64
        %v2599 = vpop.permute.xlu0 %2598
        %2600 = vrot.lane.b32.xlu0 %v2565, 64
        %v2601 = vpop.permute.xlu0 %2600
        %2602 = vrot.lane.b32.xlu0 %v2566, 64
        %v2603 = vpop.permute.xlu0 %2602
        %2604 = vrot.lane.b32.xlu0 %v2567, 64
        %v2605 = vpop.permute.xlu0 %2604
        %2606 = vrot.lane.b32.xlu0 %v2568, 64
        %v2607 = vpop.permute.xlu0 %2606
        %2608 = vrot.lane.b32.xlu0 %v2569, 64
        %v2609 = vpop.permute.xlu0 %2608
        %2610 = vrot.lane.b32.xlu0 %v2570, 64
        %v2611 = vpop.permute.xlu0 %2610
        %2612 = vrot.lane.b32.xlu0 %v2571, 64
        %v2613 = vpop.permute.xlu0 %2612
        %2614 = vrot.lane.b32.xlu0 %v2572, 64
        %v2615 = vpop.permute.xlu0 %2614
        %2616 = vrot.lane.b32.xlu0 %v2573, 64
        %v2617 = vpop.permute.xlu0 %2616
        %2618 = vrot.lane.b32.xlu0 %v2574, 64
        %v2619 = vpop.permute.xlu0 %2618
        %2620 = vrot.lane.b32.xlu0 %v2575, 64
        %v2621 = vpop.permute.xlu0 %2620
        %2622 = vrot.lane.b32.xlu0 %v2576, 64
        %v2623 = vpop.permute.xlu0 %2622
        %2624 = vrot.lane.b32.xlu0 %v2577, 64
        %v2625 = vpop.permute.xlu0 %2624
        %2658 = vrot.lane.b32.xlu0 %v1604, 64
        %v2659 = vpop.permute.xlu0 %2658
        %2660 = vrot.lane.b32.xlu0 %v1608, 64
        %v2661 = vpop.permute.xlu0 %2660
        %2662 = vrot.lane.b32.xlu0 %v1614, 64
        %v2663 = vpop.permute.xlu0 %2662
        %2664 = vrot.lane.b32.xlu0 %v1618, 64
        %v2665 = vpop.permute.xlu0 %2664
        %2666 = vrot.lane.b32.xlu0 %v1624, 64
        %v2667 = vpop.permute.xlu0 %2666
        %2668 = vrot.lane.b32.xlu0 %v1628, 64
        %v2669 = vpop.permute.xlu0 %2668
        %2670 = vrot.lane.b32.xlu0 %v1634, 64
        %v2671 = vpop.permute.xlu0 %2670
        %2672 = vrot.lane.b32.xlu0 %v1638, 64
        %v2673 = vpop.permute.xlu0 %2672
        %2674 = vrot.lane.b32.xlu0 %v1644, 64
        %v2675 = vpop.permute.xlu0 %2674
        %2676 = vrot.lane.b32.xlu0 %v1648, 64
        %v2677 = vpop.permute.xlu0 %2676
        %2678 = vrot.lane.b32.xlu0 %v1654, 64
        %v2679 = vpop.permute.xlu0 %2678
        %2680 = vrot.lane.b32.xlu0 %v1658, 64
        %v2681 = vpop.permute.xlu0 %2680
        %2682 = vrot.lane.b32.xlu0 %v1664, 64
        %v2683 = vpop.permute.xlu0 %2682
        %2684 = vrot.lane.b32.xlu0 %v1668, 64
        %v2685 = vpop.permute.xlu0 %2684
        %2686 = vrot.lane.b32.xlu0 %v1674, 64
        %v2687 = vpop.permute.xlu0 %2686
        %2688 = vrot.lane.b32.xlu0 %v1678, 64
        %v2689 = vpop.permute.xlu0 %2688
        %v2706 = vsel %vm1969, %v2595, %v2659
        %v2707 = vsel %vm1969, %v2597, %v2661
        %v2708 = vsel %vm1969, %v2599, %v2663
        %v2709 = vsel %vm1969, %v2601, %v2665
        %v2710 = vsel %vm1969, %v2603, %v2667
        %v2711 = vsel %vm1969, %v2605, %v2669
        %v2712 = vsel %vm1969, %v2607, %v2671
        %v2713 = vsel %vm1969, %v2609, %v2673
        %v2714 = vsel %vm1969, %v2611, %v2675
        %v2715 = vsel %vm1969, %v2613, %v2677
        %v2716 = vsel %vm1969, %v2615, %v2679
        %v2717 = vsel %vm1969, %v2617, %v2681
        %v2718 = vsel %vm1969, %v2619, %v2683
        %v2719 = vsel %vm1969, %v2621, %v2685
        %v2720 = vsel %vm1969, %v2623, %v2687
        %v2721 = vsel %vm1969, %v2625, %v2689
        %v2722 = vmul.f32 %v1491, %v1793
        %v2723 = vmul.f32 %v1495, %v1794
        %v2724 = vmul.f32 %v1501, %v1795
        %v2725 = vmul.f32 %v1505, %v1796
        %v2726 = vmul.f32 %v1511, %v1797
        %v2727 = vmul.f32 %v1515, %v1798
        %v2728 = vmul.f32 %v1521, %v1799
        %v2729 = vmul.f32 %v1525, %v1800
        %v2730 = vmul.f32 %v1531, %v1801
        %v2731 = vmul.f32 %v1535, %v1802
        %v2732 = vmul.f32 %v1541, %v1803
        %v2733 = vmul.f32 %v1545, %v1804
        %v2734 = vmul.f32 %v1551, %v1805
        %v2735 = vmul.f32 %v1555, %v1806
        %v2736 = vmul.f32 %v1561, %v1807
        %v2737 = vmul.f32 %v1565, %v1808
        %v2738 = vmul.f32 %v2546, %v1809
        %v2739 = vmul.f32 %v2547, %v1810
        %v2740 = vmul.f32 %v2548, %v1811
        %v2741 = vmul.f32 %v2549, %v1812
        %v2742 = vmul.f32 %v2550, %v1813
        %v2743 = vmul.f32 %v2551, %v1814
        %v2744 = vmul.f32 %v2552, %v1815
        %v2745 = vmul.f32 %v2553, %v1816
        %v2746 = vmul.f32 %v2554, %v1817
        %v2747 = vmul.f32 %v2555, %v1818
        %v2748 = vmul.f32 %v2556, %v1819
        %v2749 = vmul.f32 %v2557, %v1820
        %v2750 = vmul.f32 %v2558, %v1821
        %v2751 = vmul.f32 %v2559, %v1822
        %v2752 = vmul.f32 %v2560, %v1823
        %v2753 = vmul.f32 %v2561, %v1824
        %v2754 = vadd.f32 %v2722, %v2738
        %v2755 = vadd.f32 %v2723, %v2739
        %v2756 = vadd.f32 %v2724, %v2740
        %v2757 = vadd.f32 %v2725, %v2741
        %v2758 = vadd.f32 %v2726, %v2742
        %v2759 = vadd.f32 %v2727, %v2743
        %v2760 = vadd.f32 %v2728, %v2744
        %v2761 = vadd.f32 %v2729, %v2745
        %v2762 = vadd.f32 %v2730, %v2746
        %v2763 = vadd.f32 %v2731, %v2747
        %v2764 = vadd.f32 %v2732, %v2748
        %v2765 = vadd.f32 %v2733, %v2749
        %v2766 = vadd.f32 %v2734, %v2750
        %v2767 = vadd.f32 %v2735, %v2751
        %v2768 = vadd.f32 %v2736, %v2752
        %v2769 = vadd.f32 %v2737, %v2753
        %v2770 = vpack.c.bf16 %v2755, %v2754
        %v2771 = vpack.c.bf16 %v2757, %v2756
        %v2772 = vpack.c.bf16 %v2759, %v2758
        %v2773 = vpack.c.bf16 %v2761, %v2760
        %v2774 = vpack.c.bf16 %v2763, %v2762
        %v2775 = vpack.c.bf16 %v2765, %v2764
        %v2776 = vpack.c.bf16 %v2767, %v2766
        %v2777 = vpack.c.bf16 %v2769, %v2768
        %v2786 = vunpack.c.l.b16 %v2770
        %v2787 = vunpack.c.h.b16 %v2770
        %v2788 = vunpack.c.l.b16 %v2771
        %v2789 = vunpack.c.h.b16 %v2771
        %v2790 = vunpack.c.l.b16 %v2772
        %v2791 = vunpack.c.h.b16 %v2772
        %v2792 = vunpack.c.l.b16 %v2773
        %v2793 = vunpack.c.h.b16 %v2773
        %v2794 = vunpack.c.l.b16 %v2774
        %v2795 = vunpack.c.h.b16 %v2774
        %v2796 = vunpack.c.l.b16 %v2775
        %v2797 = vunpack.c.h.b16 %v2775
        %v2798 = vunpack.c.l.b16 %v2776
        %v2799 = vunpack.c.h.b16 %v2776
        %v2800 = vunpack.c.l.b16 %v2777
        %v2801 = vunpack.c.h.b16 %v2777
        %v2802 = vpack.c.b16 %v2786, %v2786
        %v2803 = vpack.c.b16 %v2787, %v2787
        %v2804 = vpack.c.b16 %v2788, %v2788
        %v2805 = vpack.c.b16 %v2789, %v2789
        %v2806 = vpack.c.b16 %v2790, %v2790
        %v2807 = vpack.c.b16 %v2791, %v2791
        %v2808 = vpack.c.b16 %v2792, %v2792
        %v2809 = vpack.c.b16 %v2793, %v2793
        %v2810 = vpack.c.b16 %v2794, %v2794
        %v2811 = vpack.c.b16 %v2795, %v2795
        %v2812 = vpack.c.b16 %v2796, %v2796
        %v2813 = vpack.c.b16 %v2797, %v2797
        %v2814 = vpack.c.b16 %v2798, %v2798
        %v2815 = vpack.c.b16 %v2799, %v2799
        %v2816 = vpack.c.b16 %v2800, %v2800
        %v2817 = vpack.c.b16 %v2801, %v2801
        %2834 = vst [vmem:[%s464 + $0x4] sm:$0xf] %v2802
        %2835 = vst [vmem:[%s464 + $0xc] sm:$0xf] %v2803
        %2836 = vst [vmem:[%s464 + $0x14] sm:$0xf] %v2804
        %2837 = vst [vmem:[%s464 + $0x1c] sm:$0xf] %v2805
        %2838 = vst [vmem:[%s464 + $0x24] sm:$0xf] %v2806
        %2839 = vst [vmem:[%s464 + $0x2c] sm:$0xf] %v2807
        %2840 = vst [vmem:[%s464 + $0x34] sm:$0xf] %v2808
        %2841 = vst [vmem:[%s464 + $0x3c] sm:$0xf] %v2809
        %2842 = vst [vmem:[%s464 + $0x44] sm:$0xf] %v2810
        %2843 = vst [vmem:[%s464 + $0x4c] sm:$0xf] %v2811
        %2844 = vst [vmem:[%s464 + $0x54] sm:$0xf] %v2812
        %2845 = vst [vmem:[%s464 + $0x5c] sm:$0xf] %v2813
        %2846 = vst [vmem:[%s464 + $0x64] sm:$0xf] %v2814
        %2847 = vst [vmem:[%s464 + $0x6c] sm:$0xf] %v2815
        %2848 = vst [vmem:[%s464 + $0x74] sm:$0xf] %v2816
        %2849 = vst [vmem:[%s464 + $0x7c] sm:$0xf] %v2817
        %v2850 = vmul.f32 %v1604, %v1793
        %v2851 = vmul.f32 %v1608, %v1794
        %v2852 = vmul.f32 %v1614, %v1795
        %v2853 = vmul.f32 %v1618, %v1796
        %v2854 = vmul.f32 %v1624, %v1797
        %v2855 = vmul.f32 %v1628, %v1798
        %v2856 = vmul.f32 %v1634, %v1799
        %v2857 = vmul.f32 %v1638, %v1800
        %v2858 = vmul.f32 %v1644, %v1801
        %v2859 = vmul.f32 %v1648, %v1802
        %v2860 = vmul.f32 %v1654, %v1803
        %v2861 = vmul.f32 %v1658, %v1804
        %v2862 = vmul.f32 %v1664, %v1805
        %v2863 = vmul.f32 %v1668, %v1806
        %v2864 = vmul.f32 %v1674, %v1807
        %v2865 = vmul.f32 %v1678, %v1808
        %v2866 = vmul.f32 %v2706, %v1809
        %v2867 = vmul.f32 %v2707, %v1810
        %v2868 = vmul.f32 %v2708, %v1811
        %v2869 = vmul.f32 %v2709, %v1812
        %v2870 = vmul.f32 %v2710, %v1813
        %v2871 = vmul.f32 %v2711, %v1814
        %v2872 = vmul.f32 %v2712, %v1815
        %v2873 = vmul.f32 %v2713, %v1816
        %v2874 = vmul.f32 %v2714, %v1817
        %v2875 = vmul.f32 %v2715, %v1818
        %v2876 = vmul.f32 %v2716, %v1819
        %v2877 = vmul.f32 %v2717, %v1820
        %v2878 = vmul.f32 %v2718, %v1821
        %v2879 = vmul.f32 %v2719, %v1822
        %v2880 = vmul.f32 %v2720, %v1823
        %v2881 = vmul.f32 %v2721, %v1824
        %v2882 = vadd.f32 %v2850, %v2866
        %v2883 = vadd.f32 %v2851, %v2867
        %v2884 = vadd.f32 %v2852, %v2868
        %v2885 = vadd.f32 %v2853, %v2869
        %v2886 = vadd.f32 %v2854, %v2870
        %v2887 = vadd.f32 %v2855, %v2871
        %v2888 = vadd.f32 %v2856, %v2872
        %v2889 = vadd.f32 %v2857, %v2873
        %v2890 = vadd.f32 %v2858, %v2874
        %v2891 = vadd.f32 %v2859, %v2875
        %v2892 = vadd.f32 %v2860, %v2876
        %v2893 = vadd.f32 %v2861, %v2877
        %v2894 = vadd.f32 %v2862, %v2878
        %v2895 = vadd.f32 %v2863, %v2879
        %v2896 = vadd.f32 %v2864, %v2880
        %v2897 = vadd.f32 %v2865, %v2881
        %v2898 = vpack.c.bf16 %v2883, %v2882
        %v2899 = vpack.c.bf16 %v2885, %v2884
        %v2900 = vpack.c.bf16 %v2887, %v2886
        %v2901 = vpack.c.bf16 %v2889, %v2888
        %v2902 = vpack.c.bf16 %v2891, %v2890
        %v2903 = vpack.c.bf16 %v2893, %v2892
        %v2904 = vpack.c.bf16 %v2895, %v2894
        %v2905 = vpack.c.bf16 %v2897, %v2896
        %v2914 = vunpack.c.l.b16 %v2898
        %v2915 = vunpack.c.h.b16 %v2898
        %v2916 = vunpack.c.l.b16 %v2899
        %v2917 = vunpack.c.h.b16 %v2899
        %v2918 = vunpack.c.l.b16 %v2900
        %v2919 = vunpack.c.h.b16 %v2900
        %v2920 = vunpack.c.l.b16 %v2901
        %v2921 = vunpack.c.h.b16 %v2901
        %v2922 = vunpack.c.l.b16 %v2902
        %v2923 = vunpack.c.h.b16 %v2902
        %v2924 = vunpack.c.l.b16 %v2903
        %v2925 = vunpack.c.h.b16 %v2903
        %v2926 = vunpack.c.l.b16 %v2904
        %v2927 = vunpack.c.h.b16 %v2904
        %v2928 = vunpack.c.l.b16 %v2905
        %v2929 = vunpack.c.h.b16 %v2905
        %v2930 = vpack.c.b16 %v2914, %v2914
        %v2931 = vpack.c.b16 %v2915, %v2915
        %v2932 = vpack.c.b16 %v2916, %v2916
        %v2933 = vpack.c.b16 %v2917, %v2917
        %v2934 = vpack.c.b16 %v2918, %v2918
        %v2935 = vpack.c.b16 %v2919, %v2919
        %v2936 = vpack.c.b16 %v2920, %v2920
        %v2937 = vpack.c.b16 %v2921, %v2921
        %v2938 = vpack.c.b16 %v2922, %v2922
        %v2939 = vpack.c.b16 %v2923, %v2923
        %v2940 = vpack.c.b16 %v2924, %v2924
        %v2941 = vpack.c.b16 %v2925, %v2925
        %v2942 = vpack.c.b16 %v2926, %v2926
        %v2943 = vpack.c.b16 %v2927, %v2927
        %v2944 = vpack.c.b16 %v2928, %v2928
        %v2945 = vpack.c.b16 %v2929, %v2929
        %2962 = vst [vmem:[%s471 + $0x4] sm:$0xf] %v2930
        %2963 = vst [vmem:[%s471 + $0xc] sm:$0xf] %v2931
        %2964 = vst [vmem:[%s471 + $0x14] sm:$0xf] %v2932
        %2965 = vst [vmem:[%s471 + $0x1c] sm:$0xf] %v2933
        %2966 = vst [vmem:[%s471 + $0x24] sm:$0xf] %v2934
        %2967 = vst [vmem:[%s471 + $0x2c] sm:$0xf] %v2935
        %2968 = vst [vmem:[%s471 + $0x34] sm:$0xf] %v2936
        %2969 = vst [vmem:[%s471 + $0x3c] sm:$0xf] %v2937
        %2970 = vst [vmem:[%s471 + $0x44] sm:$0xf] %v2938
        %2971 = vst [vmem:[%s471 + $0x4c] sm:$0xf] %v2939
        %2972 = vst [vmem:[%s471 + $0x54] sm:$0xf] %v2940
        %2973 = vst [vmem:[%s471 + $0x5c] sm:$0xf] %v2941
        %2974 = vst [vmem:[%s471 + $0x64] sm:$0xf] %v2942
        %2975 = vst [vmem:[%s471 + $0x6c] sm:$0xf] %v2943
        %2976 = vst [vmem:[%s471 + $0x74] sm:$0xf] %v2944
        %2977 = vst [vmem:[%s471 + $0x7c] sm:$0xf] %v2945
        %v2978 = vpack.c.bf16 %v1719, %v1715
        %v2979 = vpack.c.bf16 %v1721, %v1717
        %v2980 = vpack.c.bf16 %v1729, %v1725
        %v2981 = vpack.c.bf16 %v1731, %v1727
        %v2982 = vpack.c.bf16 %v1739, %v1735
        %v2983 = vpack.c.bf16 %v1741, %v1737
        %v2984 = vpack.c.bf16 %v1749, %v1745
        %v2985 = vpack.c.bf16 %v1751, %v1747
        %v2986 = vpack.c.bf16 %v1759, %v1755
        %v2987 = vpack.c.bf16 %v1761, %v1757
        %v2988 = vpack.c.bf16 %v1769, %v1765
        %v2989 = vpack.c.bf16 %v1771, %v1767
        %v2990 = vpack.c.bf16 %v1779, %v1775
        %v2991 = vpack.c.bf16 %v1781, %v1777
        %v2992 = vpack.c.bf16 %v1789, %v1785
        %v2993 = vpack.c.bf16 %v1791, %v1787
        %v3010 = vunpack.c.l.b16 %v2978
        %v3011 = vunpack.c.l.b16 %v2979
        %v3012 = vunpack.c.h.b16 %v2978
        %v3013 = vunpack.c.h.b16 %v2979
        %v3014 = vunpack.c.l.b16 %v2980
        %v3015 = vunpack.c.l.b16 %v2981
        %v3016 = vunpack.c.h.b16 %v2980
        %v3017 = vunpack.c.h.b16 %v2981
        %v3018 = vunpack.c.l.b16 %v2982
        %v3019 = vunpack.c.l.b16 %v2983
        %v3020 = vunpack.c.h.b16 %v2982
        %v3021 = vunpack.c.h.b16 %v2983
        %v3022 = vunpack.c.l.b16 %v2984
        %v3023 = vunpack.c.l.b16 %v2985
        %v3024 = vunpack.c.h.b16 %v2984
        %v3025 = vunpack.c.h.b16 %v2985
        %v3026 = vunpack.c.l.b16 %v2986
        %v3027 = vunpack.c.l.b16 %v2987
        %v3028 = vunpack.c.h.b16 %v2986
        %v3029 = vunpack.c.h.b16 %v2987
        %v3030 = vunpack.c.l.b16 %v2988
        %v3031 = vunpack.c.l.b16 %v2989
        %v3032 = vunpack.c.h.b16 %v2988
        %v3033 = vunpack.c.h.b16 %v2989
        %v3034 = vunpack.c.l.b16 %v2990
        %v3035 = vunpack.c.l.b16 %v2991
        %v3036 = vunpack.c.h.b16 %v2990
        %v3037 = vunpack.c.h.b16 %v2991
        %v3038 = vunpack.c.l.b16 %v2992
        %v3039 = vunpack.c.l.b16 %v2993
        %v3040 = vunpack.c.h.b16 %v2992
        %v3041 = vunpack.c.h.b16 %v2993
        %v3042 = vpack.c.b16 %v3011, %v3010
        %v3043 = vpack.c.b16 %v3013, %v3012
        %v3044 = vpack.c.b16 %v3015, %v3014
        %v3045 = vpack.c.b16 %v3017, %v3016
        %v3046 = vpack.c.b16 %v3019, %v3018
        %v3047 = vpack.c.b16 %v3021, %v3020
        %v3048 = vpack.c.b16 %v3023, %v3022
        %v3049 = vpack.c.b16 %v3025, %v3024
        %v3050 = vpack.c.b16 %v3027, %v3026
        %v3051 = vpack.c.b16 %v3029, %v3028
        %v3052 = vpack.c.b16 %v3031, %v3030
        %v3053 = vpack.c.b16 %v3033, %v3032
        %v3054 = vpack.c.b16 %v3035, %v3034
        %v3055 = vpack.c.b16 %v3037, %v3036
        %v3056 = vpack.c.b16 %v3039, %v3038
        %v3057 = vpack.c.b16 %v3041, %v3040
        %3074 = vst [vmem:[%s478] sm:$0xff] %v3042
        %3075 = vst [vmem:[%s478 + $0x8] sm:$0xff] %v3043
        %3076 = vst [vmem:[%s478 + $0x10] sm:$0xff] %v3044
        %3077 = vst [vmem:[%s478 + $0x18] sm:$0xff] %v3045
        %3078 = vst [vmem:[%s478 + $0x20] sm:$0xff] %v3046
        %3079 = vst [vmem:[%s478 + $0x28] sm:$0xff] %v3047
        %3080 = vst [vmem:[%s478 + $0x30] sm:$0xff] %v3048
        %3081 = vst [vmem:[%s478 + $0x38] sm:$0xff] %v3049
        %3082 = vst [vmem:[%s478 + $0x40] sm:$0xff] %v3050
        %3083 = vst [vmem:[%s478 + $0x48] sm:$0xff] %v3051
        %3084 = vst [vmem:[%s478 + $0x50] sm:$0xff] %v3052
        %3085 = vst [vmem:[%s478 + $0x58] sm:$0xff] %v3053
        %3086 = vst [vmem:[%s478 + $0x60] sm:$0xff] %v3054
        %3087 = vst [vmem:[%s478 + $0x68] sm:$0xff] %v3055
        %3088 = vst [vmem:[%s478 + $0x70] sm:$0xff] %v3056
        %3089 = vst [vmem:[%s478 + $0x78] sm:$0xff] %v3057
        %s3090 = sand.u32 %s196, 1
        %s3091 = scalar_lea.sflag [#allocation4], %s3090
        %s3092 = sand.u32 %s196, 1
        %s3093 = smul.addr %s3092, 128
        %s3094 = scalar_lea.vmem [#allocation12], %s3093
        %s3095 = sand.u32 %s31, 1
        %s3096 = scalar_lea.sflag [#allocation14], %s3095
        %s3097 = sand.u32 %s224, 1
        %s3098 = smul.addr %s3097, 128
        %s3099 = scalar_lea.vmem [#allocation13], %s3098
        %s3100 = sand.u32 %s31, 1
        %s3101 = scalar_lea.sflag [#allocation14], %s3100
        %s3102 = sand.u32 %s252, 1
        %s3103 = smul.addr %s3102, 128
        %s3104 = scalar_lea.vmem [#allocation15], %s3103
        // Predicated region
        $region69: #{tpu_custom_call.1} parent=43 // pred_check
          %p3105 = pneg %p206
        $region70: #{tpu_custom_call.1} parent=43 // pred_check_branch
          %3107 = sbr.rel (%p3105) target = $region72
        $region71: #{tpu_custom_call.1} parent=43 // pred_region
          %s3108 = smul.u32 16, %s36
          %s3110 = ssub.s32 2048, 2048
          %3111 = vsyncadd %s3091, %s3110
          %s3112 = smul.addr %s3108, 2
          %s3113 = smul.addr %s35, 64
          %s3114 = sadd.s32 %s3112, %s3113
          %s3115 = smul.addr %s3114, 64
          %s3116 = scalar_lea.hbm %s6, %s3115
          %s3117 = sshll.u32 %s3094, 4
          %s3118 = int_to_ptr.vmem [resolvable:$true] %s3117
          %3123 = dma.vmem_to_hbm [thread:$0]  %s3118, 2048, %s3116, %s3091, 128, 128, 8
        $region72: #{tpu_custom_call.1} parent=43 // pred_fallthru
          _
        // Predicated region
        $region73: #{tpu_custom_call.1} parent=43 // pred_check
          %p3124 = pneg %p234
        $region74: #{tpu_custom_call.1} parent=43 // pred_check_branch
          %3126 = sbr.rel (%p3124) target = $region76
        $region75: #{tpu_custom_call.1} parent=43 // pred_region
          %s3127 = smul.u32 16, %s36
          %s3129 = ssub.s32 2048, 2048
          %3130 = vsyncadd %s3096, %s3129
          %s3131 = smul.addr %s3127, 2
          %s3132 = smul.addr %s35, 64
          %s3133 = sadd.s32 %s3131, %s3132
          %s3134 = smul.addr %s3133, 64
          %s3135 = scalar_lea.hbm %s7, %s3134
          %s3136 = sshll.u32 %s3099, 4
          %s3137 = int_to_ptr.vmem [resolvable:$true] %s3136
          %3142 = dma.vmem_to_hbm [thread:$0]  %s3137, 2048, %s3135, %s3096, 128, 128, 8
        $region76: #{tpu_custom_call.1} parent=43 // pred_fallthru
          _
        // Predicated region
        $region77: #{tpu_custom_call.1} parent=43 // pred_check
          %p3143 = pneg %p262
        $region78: #{tpu_custom_call.1} parent=43 // pred_check_branch
          %3145 = sbr.rel (%p3143) target = $region80
        $region79: #{tpu_custom_call.1} parent=43 // pred_region
          %s3146 = smul.u32 16, %s36
          %s3148 = ssub.s32 2048, 2048
          %3149 = vsyncadd %s3101, %s3148
          %s3150 = smul.addr %s3146, 2
          %s3151 = smul.addr %s35, 64
          %s3152 = sadd.s32 %s3150, %s3151
          %s3153 = smul.addr %s3152, 64
          %s3154 = scalar_lea.hbm %s8, %s3153
          %s3155 = sshll.u32 %s3104, 4
          %s3156 = int_to_ptr.vmem [resolvable:$true] %s3155
          %3161 = dma.vmem_to_hbm [thread:$0]  %s3156, 2048, %s3154, %s3101, 128, 128, 8
        $region80: #{tpu_custom_call.1} parent=43 // pred_fallthru
          _
      $region44: #{tpu_custom_call.1} parent=5 // pred_fallthru
        _
      %p3162 = scmp.le.s32.totalorder 2, %s26
      // Predicated region
      $region81: #{tpu_custom_call.1} parent=5 // pred_check
        %p3163 = pneg %p3162
      $region82: #{tpu_custom_call.1} parent=5 // pred_check_branch
        %3165 = sbr.rel (%p3163) target = $region84
      $region83: #{tpu_custom_call.1} parent=5 // pred_region
        %s3166 = ssub.s32 %s26, 2
        // Predicated region
        $region85: #{tpu_custom_call.1} parent=83 // pred_check
          %p3167 = pneg %p212
        $region86: #{tpu_custom_call.1} parent=83 // pred_check_branch
          %3169 = sbr.rel (%p3167) target = $region88
        $region87: #{tpu_custom_call.1} parent=83 // pred_region
          %s3170 = sand.u32 %s197, 1
          %s3171 = scalar_lea.sflag [#allocation4], %s3170
          %s3172 = sand.u32 %s197, 1
          %s3173 = smul.addr %s3172, 128
          %s3174 = scalar_lea.vmem [#allocation12], %s3173
          %3175 = dma.done %s3171, 2048
        $region88: #{tpu_custom_call.1} parent=83 // pred_fallthru
          _
        // Predicated region
        $region89: #{tpu_custom_call.1} parent=83 // pred_check
          %p3176 = pneg %p240
        $region90: #{tpu_custom_call.1} parent=83 // pred_check_branch
          %3178 = sbr.rel (%p3176) target = $region92
        $region91: #{tpu_custom_call.1} parent=83 // pred_region
          %s3179 = sand.u32 %s32, 1
          %s3180 = scalar_lea.sflag [#allocation14], %s3179
          %s3181 = sand.u32 %s225, 1
          %s3182 = smul.addr %s3181, 128
          %s3183 = scalar_lea.vmem [#allocation13], %s3182
          %3184 = dma.done %s3180, 2048
        $region92: #{tpu_custom_call.1} parent=83 // pred_fallthru
          _
        // Predicated region
        $region93: #{tpu_custom_call.1} parent=83 // pred_check
          %p3185 = pneg %p268
        $region94: #{tpu_custom_call.1} parent=83 // pred_check_branch
          %3187 = sbr.rel (%p3185) target = $region96
        $region95: #{tpu_custom_call.1} parent=83 // pred_region
          %s3188 = sand.u32 %s32, 1
          %s3189 = scalar_lea.sflag [#allocation14], %s3188
          %s3190 = sand.u32 %s253, 1
          %s3191 = smul.addr %s3190, 128
          %s3192 = scalar_lea.vmem [#allocation15], %s3191
          %3193 = dma.done %s3189, 2048
        $region96: #{tpu_custom_call.1} parent=83 // pred_fallthru
          _
      $region84: #{tpu_custom_call.1} parent=5 // pred_fallthru
        _
    $region6: #{tpu_custom_call.1} parent=1 // loop_footer
      %s30 = sadd.s32 1, %s26
    $region7: #{tpu_custom_call.1} parent=1 // loop_footer_branch
      %25 = sbr.rel target = $region3
    $region8: #{tpu_custom_call.1} parent=1 // loop_exit
      _
    %3194 = vsyncpa [#allocation3], 1
    %s3195 = scalar_lea.sflag [#allocation3], 1
    %3196 = vsyncpa %s3195, 1
    %3197 = vsyncpa [#allocation6], 1
    %3198 = vsyncpa [#allocation9], 1
    %3199 = vsyncpa [#allocation4], 1
    %s3200 = scalar_lea.sflag [#allocation4], 1
    %3201 = vsyncpa %s3200, 1
    %3202 = vsyncpa [#allocation14], 1
    %s3203 = scalar_lea.sflag [#allocation14], 1
    %3204 = vsyncpa %s3203, 1

</llo_original>
